<compile_context>
chip_gen: v5e
topology: v5e:2x2
jax: 0.10.0
libtpu: 0.0.40
codegen_flags: <defaults>
</compile_context>

<pallas_src>
import functools

import jax
import jax.numpy as jnp
from jax.experimental import pallas as pl
from jax.experimental.pallas import tpu as pltpu


def _edsr_fused_kernel(x_ref, w1_ref, b1_ref, w2_ref, b2_ref, w3_ref, b3_ref,
                       mask_ref, o_ref, *, H, W, Ws, KH1, KW1, KH3, KW3, PAD3):
    """One batch element per grid step.

    Layout: channels on sublanes, flattened padded rows (row stride Ws) on
    lanes ("working grid", length M1 = H*Ws).  Columns x in [W, Ws) of each
    row are garbage; they are zeroed once before conv3 (they become conv3's
    zero padding) and dropped by the wrapper.

    x_ref    : (1, 3, L1)  bf16  flattened padded input rows (+ small tail)
    w1_ref   : (64, 243)   bf16  conv1 weights, k ordered (dy, dx, ci)
    b1_ref   : (64, 1)     f32
    w2_ref   : (32, 64)    bf16
    b2_ref   : (32, 1)     f32
    w3_ref   : (8, 800)    bf16  conv3 weights, k ordered (dy, dx, c2), Cout 3->8
    b3_ref   : (8, 1)      f32   (padded)
    mask_ref : (1, M1)     f32   1.0 on valid columns (x < W), 0.0 elsewhere
    o_ref    : (1, 8, M1)  f32   working-grid output, lane-dense
    """
    M1 = H * Ws
    C2 = w2_ref.shape[0]
    xf = x_ref[0]                                           # (3, L1) bf16

    # ---- conv1: im2col built in VMEM (fold dx, then dy) -> one K=243 matmul.
    LA = M1 + (KH1 - 1) * Ws
    acols = jnp.concatenate([xf[:, dx:dx + LA] for dx in range(KW1)], axis=0)
    r1 = jnp.concatenate(
        [acols[:, dy * Ws:dy * Ws + M1] for dy in range(KH1)], axis=0)  # (243, M1)
    a1 = jnp.dot(w1_ref[...], r1, preferred_element_type=jnp.float32)
    a1 = jnp.maximum(a1 + b1_ref[...], 0.0)                 # (64, M1) f32

    # ---- conv2 (1x1): plain matmul + bias + ReLU.
    a2 = jnp.dot(w2_ref[...], a1.astype(jnp.bfloat16),
                 preferred_element_type=jnp.float32)
    a2 = jnp.maximum(a2 + b2_ref[...], 0.0)                 # (32, M1) f32

    # ---- conv3 input: zero out-of-image columns once, cast to bf16 once, and
    # add a zero halo so every tap shift is a plain positive static lane slice.
    a2m = (a2 * mask_ref[...]).astype(jnp.bfloat16)         # (32, M1)
    E = PAD3 * Ws + PAD3
    z = jnp.zeros((C2, E), jnp.bfloat16)
    a2e = jnp.concatenate([z, a2m, z], axis=1)              # (32, M1 + 2E)

    # ---- conv3: per-dy fold (dx, c2) into K=160; accumulate in registers
    # (initialized with the broadcast bias); single store at the end.
    KF = KW3 * C2
    acc = jnp.broadcast_to(b3_ref[...], (w3_ref.shape[0], M1))  # (8, M1) f32
    for dy in range(KH3):
        rdy = jnp.concatenate(
            [a2e[:, dy * Ws + dx:dy * Ws + dx + M1] for dx in range(KW3)],
            axis=0)                                         # (160, M1) bf16
        acc = acc + jnp.dot(w3_ref[:, dy * KF:(dy + 1) * KF], rdy,
                            preferred_element_type=jnp.float32)

    o_ref[0] = acc


def edsr_forward(x_nchw, params):
    N, Cin, H, W = x_nchw.shape
    assert Cin == 3, "EDSR conv1 expects 3 input channels"
    KH1 = KW1 = 9
    PAD1 = 4
    KH3 = KW3 = 5
    PAD3 = 2
    C1, C2, C3 = 64, 32, 3
    C3P = 8                                    # Cout padded 3 -> 8 (one sublane tile)

    Ws = W + 2 * PAD1                          # shared row stride for all layers
    Hp1 = H + 2 * PAD1
    M1 = H * Ws                                # working spatial length (valid + pad cols)
    L1 = Hp1 * Ws + (KW1 - 1)                  # flattened padded input + small tail
    K1 = KH1 * KW1 * Cin                       # 243
    K3 = KH3 * KW3 * C2                        # 800

    # Raw input only (~6 B/px): NCHW pad spatially, flatten rows, small zero tail.
    xpad = jnp.pad(x_nchw, ((0, 0), (0, 0), (PAD1, PAD1), (PAD1, PAD1)))
    xflat = xpad.reshape(N, Cin, Hp1 * Ws)
    xflat = jnp.pad(xflat, ((0, 0), (0, 0), (0, L1 - Hp1 * Ws))).astype(jnp.bfloat16)

    # Transposed weights: (Cout, K), K ordered (dy, dx, cin).
    w1t = params["w1"].reshape(K1, C1).T.astype(jnp.bfloat16)              # (64, 243)
    w2t = params["w2"].reshape(C1, C2).T.astype(jnp.bfloat16)              # (32, 64)
    w3t = jnp.pad(params["w3"].reshape(K3, C3).T,
                  ((0, C3P - C3), (0, 0))).astype(jnp.bfloat16)            # (8, 800)
    b1 = params["b1"].reshape(C1, 1).astype(jnp.float32)
    b2 = params["b2"].reshape(C2, 1).astype(jnp.float32)
    b3 = jnp.pad(params["b3"], (0, C3P - C3)).reshape(C3P, 1).astype(jnp.float32)

    # 1.0 on valid columns (x < W within each stride-Ws row).
    col_mask = (jnp.arange(M1) % Ws < W).astype(jnp.float32).reshape(1, M1)

    kernel = functools.partial(_edsr_fused_kernel, H=H, W=W, Ws=Ws,
                               KH1=KH1, KW1=KW1, KH3=KH3, KW3=KW3, PAD3=PAD3)

    flops = 2 * N * M1 * (K1 * C1 + C1 * C2 + K3 * C3P)
    bytes_accessed = (xflat.size * 2 + (w1t.size + w2t.size + w3t.size) * 2
                      + (b1.size + b2.size + b3.size + col_mask.size) * 4
                      + N * C3P * M1 * 4)

    # TODO(synk): for real SR resolutions add a row-tile grid axis ("parallel")
    # with a (PAD1+PAD3)-row recompute halo for conv1/conv2 (halo rows outside
    # the image masked to zero like the column mask) so v7x's two TensorCores
    # pipeline, and cap per-step VMEM (<= ~24 MiB) via
    # pltpu.CompilerParams(vmem_limit_bytes=...) for v7x's 64 MiB VMEM.
    out_work = pl.pallas_call(
        kernel,
        out_shape=jax.ShapeDtypeStruct((N, C3P, M1), jnp.float32),
        grid=(N,),
        in_specs=[
            pl.BlockSpec((1, Cin, L1), lambda n: (n, 0, 0)),
            pl.BlockSpec((C1, K1), lambda n: (0, 0)),
            pl.BlockSpec((C1, 1), lambda n: (0, 0)),
            pl.BlockSpec((C2, C1), lambda n: (0, 0)),
            pl.BlockSpec((C2, 1), lambda n: (0, 0)),
            pl.BlockSpec((C3P, K3), lambda n: (0, 0)),
            pl.BlockSpec((C3P, 1), lambda n: (0, 0)),
            pl.BlockSpec((1, M1), lambda n: (0, 0)),
        ],
        out_specs=pl.BlockSpec((1, C3P, M1), lambda n: (n, 0, 0)),
        compiler_params=pltpu.CompilerParams(
            dimension_semantics=("parallel",)),
        cost_estimate=pl.CostEstimate(
            flops=flops, transcendentals=0, bytes_accessed=bytes_accessed),
    )(xflat, w1t, b1, w2t, b2, w3t, b3, col_mask)

    # Working grid -> NCHW: drop padded channels and out-of-image columns.
    out = out_work.reshape(N, C3P, H, Ws)[:, :C3, :, :W]
    return out


def init_edsr_params(key):
    """Deterministic synthetic parameters matching the module's conv shapes."""
    ks = jax.random.split(key, 6)

    def conv_params(kw_key, kb_key, kh, kwid, cin, cout):
        fan_in = kh * kwid * cin
        scale = 1.0 / jnp.sqrt(jnp.float32(fan_in))
        w = jax.random.uniform(
            kw_key, (kh, kwid, cin, cout), jnp.float32, -scale, scale)
        b = jax.random.uniform(kb_key, (cout,), jnp.float32, -scale, scale)
        return w, b

    w1, b1 = conv_params(ks[0], ks[1], 9, 9, 3, 64)    # conv1: 3->64, k=9, pad=4
    w2, b2 = conv_params(ks[2], ks[3], 1, 1, 64, 32)   # conv2: 64->32, k=1
    w3, b3 = conv_params(ks[4], ks[5], 5, 5, 32, 3)    # conv3: 32->3, k=5, pad=2
    return dict(w1=w1, b1=b1, w2=w2, b2=b2, w3=w3, b3=b3)


def edsr_reference(x_nchw, params):
    """Pure-JAX reference mirroring the kernel's bf16-input / f32-accum math."""
    x = jnp.transpose(x_nchw, (0, 2, 3, 1))

    def conv(h, w, b, pad, relu):
        y = jax.lax.conv_general_dilated(
            h.astype(jnp.bfloat16), w.astype(jnp.bfloat16),
            window_strides=(1, 1), padding=((pad, pad), (pad, pad)),
            dimension_numbers=("NHWC", "HWIO", "NHWC"),
            preferred_element_type=jnp.float32)
        y = y + b[None, None, None, :].astype(jnp.float32)
        return jnp.maximum(y, 0.0) if relu else y

    out = conv(x, params["w1"], params["b1"], 4, True)
    out = conv(out, params["w2"], params["b2"], 0, True)
    out = conv(out, params["w3"], params["b3"], 2, False)
    return jnp.transpose(out, (0, 3, 1, 2))


if __name__ == "__main__":
    key = jax.random.PRNGKey(0)
    k_params, k_x = jax.random.split(key)

    params = init_edsr_params(k_params)
    # PyTorch convention: NCHW with 3 input channels (conv1 expects 3).
    x = jax.random.normal(k_x, (2, 3, 16, 16), jnp.float32)

    fwd = jax.jit(edsr_forward)
    ref_fn = jax.jit(edsr_reference)

    out = jax.block_until_ready(fwd(x, params))
    ref = jax.block_until_ready(ref_fn(x, params))

    assert out.shape == (2, 3, 16, 16), out.shape
    max_err = float(jnp.max(jnp.abs(out - ref)))
    assert max_err < 5e-3, f"max abs err {max_err}"

    print("KERNEL_OK")
</pallas_src>

<mosaic_0001>
module attributes {stable_mosaic.version = 11 : i64} {
  func.func @_edsr_fused_kernel(%arg0: i32, %arg1: memref<1x3x584xbf16, #tpu.memory_space<vmem>>, %arg2: memref<64x243xbf16, #tpu.memory_space<vmem>>, %arg3: memref<64x1xf32, #tpu.memory_space<vmem>>, %arg4: memref<32x64xbf16, #tpu.memory_space<vmem>>, %arg5: memref<32x1xf32, #tpu.memory_space<vmem>>, %arg6: memref<8x800xbf16, #tpu.memory_space<vmem>>, %arg7: memref<8x1xf32, #tpu.memory_space<vmem>>, %arg8: memref<1x384xf32, #tpu.memory_space<vmem>>, %arg9: memref<1x8x384xf32, #tpu.memory_space<vmem>>) attributes {dimension_semantics = [#tpu.dimension_semantics<parallel>], iteration_bounds = array<i64: 2>, scalar_prefetch = 0 : i64, scratch_operands = 0 : i64, tpu.core_type = #tpu.core_type<tc>, window_params = [{transform_indices = @transform_0, window_bounds = array<i64: 1, 3, 584>}, {pipeline_mode = #tpu.pipeline_mode<synchronous>, transform_indices = @transform_1, window_bounds = array<i64: 64, 243>}, {pipeline_mode = #tpu.pipeline_mode<synchronous>, transform_indices = @transform_2, window_bounds = array<i64: 64, 1>}, {pipeline_mode = #tpu.pipeline_mode<synchronous>, transform_indices = @transform_3, window_bounds = array<i64: 32, 64>}, {pipeline_mode = #tpu.pipeline_mode<synchronous>, transform_indices = @transform_4, window_bounds = array<i64: 32, 1>}, {pipeline_mode = #tpu.pipeline_mode<synchronous>, transform_indices = @transform_5, window_bounds = array<i64: 8, 800>}, {pipeline_mode = #tpu.pipeline_mode<synchronous>, transform_indices = @transform_6, window_bounds = array<i64: 8, 1>}, {pipeline_mode = #tpu.pipeline_mode<synchronous>, transform_indices = @transform_7, window_bounds = array<i64: 1, 384>}, {transform_indices = @transform_8, window_bounds = array<i64: 1, 8, 384>}]} {
    %c0 = arith.constant 0 : index
    %c0_0 = arith.constant 0 : index
    %c0_1 = arith.constant 0 : index
    %0 = vector.load %arg1[%c0, %c0_0, %c0_1] : memref<1x3x584xbf16, #tpu.memory_space<vmem>>, vector<1x3x584xbf16>
    %1 = vector.shape_cast %0 : vector<1x3x584xbf16> to vector<3x584xbf16>
    %2 = vector.extract_strided_slice %1 {offsets = [0, 0], sizes = [3, 576], strides = [1, 1]} : vector<3x584xbf16> to vector<3x576xbf16>
    %3 = vector.extract_strided_slice %1 {offsets = [0, 1], sizes = [3, 576], strides = [1, 1]} : vector<3x584xbf16> to vector<3x576xbf16>
    %4 = vector.extract_strided_slice %1 {offsets = [0, 2], sizes = [3, 576], strides = [1, 1]} : vector<3x584xbf16> to vector<3x576xbf16>
    %5 = vector.extract_strided_slice %1 {offsets = [0, 3], sizes = [3, 576], strides = [1, 1]} : vector<3x584xbf16> to vector<3x576xbf16>
    %6 = vector.extract_strided_slice %1 {offsets = [0, 4], sizes = [3, 576], strides = [1, 1]} : vector<3x584xbf16> to vector<3x576xbf16>
    %7 = vector.extract_strided_slice %1 {offsets = [0, 5], sizes = [3, 576], strides = [1, 1]} : vector<3x584xbf16> to vector<3x576xbf16>
    %8 = vector.extract_strided_slice %1 {offsets = [0, 6], sizes = [3, 576], strides = [1, 1]} : vector<3x584xbf16> to vector<3x576xbf16>
    %9 = vector.extract_strided_slice %1 {offsets = [0, 7], sizes = [3, 576], strides = [1, 1]} : vector<3x584xbf16> to vector<3x576xbf16>
    %10 = vector.extract_strided_slice %1 {offsets = [0, 8], sizes = [3, 576], strides = [1, 1]} : vector<3x584xbf16> to vector<3x576xbf16>
    %11 = tpu.concatenate %2, %3, %4, %5, %6, %7, %8, %9, %10 in 0 : vector<3x576xbf16>, vector<3x576xbf16>, vector<3x576xbf16>, vector<3x576xbf16>, vector<3x576xbf16>, vector<3x576xbf16>, vector<3x576xbf16>, vector<3x576xbf16>, vector<3x576xbf16> -> vector<27x576xbf16>
    %12 = vector.extract_strided_slice %11 {offsets = [0, 0], sizes = [27, 384], strides = [1, 1]} : vector<27x576xbf16> to vector<27x384xbf16>
    %13 = vector.extract_strided_slice %11 {offsets = [0, 24], sizes = [27, 384], strides = [1, 1]} : vector<27x576xbf16> to vector<27x384xbf16>
    %14 = vector.extract_strided_slice %11 {offsets = [0, 48], sizes = [27, 384], strides = [1, 1]} : vector<27x576xbf16> to vector<27x384xbf16>
    %15 = vector.extract_strided_slice %11 {offsets = [0, 72], sizes = [27, 384], strides = [1, 1]} : vector<27x576xbf16> to vector<27x384xbf16>
    %16 = vector.extract_strided_slice %11 {offsets = [0, 96], sizes = [27, 384], strides = [1, 1]} : vector<27x576xbf16> to vector<27x384xbf16>
    %17 = vector.extract_strided_slice %11 {offsets = [0, 120], sizes = [27, 384], strides = [1, 1]} : vector<27x576xbf16> to vector<27x384xbf16>
    %18 = vector.extract_strided_slice %11 {offsets = [0, 144], sizes = [27, 384], strides = [1, 1]} : vector<27x576xbf16> to vector<27x384xbf16>
    %19 = vector.extract_strided_slice %11 {offsets = [0, 168], sizes = [27, 384], strides = [1, 1]} : vector<27x576xbf16> to vector<27x384xbf16>
    %20 = vector.extract_strided_slice %11 {offsets = [0, 192], sizes = [27, 384], strides = [1, 1]} : vector<27x576xbf16> to vector<27x384xbf16>
    %21 = tpu.concatenate %12, %13, %14, %15, %16, %17, %18, %19, %20 in 0 : vector<27x384xbf16>, vector<27x384xbf16>, vector<27x384xbf16>, vector<27x384xbf16>, vector<27x384xbf16>, vector<27x384xbf16>, vector<27x384xbf16>, vector<27x384xbf16>, vector<27x384xbf16> -> vector<243x384xbf16>
    %c0_2 = arith.constant 0 : index
    %c0_3 = arith.constant 0 : index
    %22 = vector.load %arg2[%c0_2, %c0_3] : memref<64x243xbf16, #tpu.memory_space<vmem>>, vector<64x243xbf16>
    %cst = arith.constant dense<0.000000e+00> : vector<64x384xf32>
    %23 = tpu.matmul %22, %21, %cst {dimension_numbers = #tpu.dot_dimension_numbers<[1], [0], [0], [1], [0, 0, 1, 1], [], []>} : vector<64x243xbf16>, vector<243x384xbf16>, vector<64x384xf32> -> vector<64x384xf32>
    %c0_4 = arith.constant 0 : index
    %c0_5 = arith.constant 0 : index
    %24 = vector.load %arg3[%c0_4, %c0_5] : memref<64x1xf32, #tpu.memory_space<vmem>>, vector<64x1xf32>
    %25 = vector.broadcast %24 : vector<64x1xf32> to vector<64x384xf32>
    %26 = arith.addf %23, %25 : vector<64x384xf32>
    %cst_6 = arith.constant 0.000000e+00 : f32
    %27 = vector.broadcast %cst_6 : f32 to vector<64x384xf32>
    %28 = arith.maximumf %26, %27 : vector<64x384xf32>
    %c0_7 = arith.constant 0 : index
    %c0_8 = arith.constant 0 : index
    %29 = vector.load %arg4[%c0_7, %c0_8] : memref<32x64xbf16, #tpu.memory_space<vmem>>, vector<32x64xbf16>
    %30 = arith.truncf %28 : vector<64x384xf32> to vector<64x384xbf16>
    %cst_9 = arith.constant dense<0.000000e+00> : vector<32x384xf32>
    %31 = tpu.matmul %29, %30, %cst_9 {dimension_numbers = #tpu.dot_dimension_numbers<[1], [0], [0], [1], [0, 0, 1, 1], [], []>} : vector<32x64xbf16>, vector<64x384xbf16>, vector<32x384xf32> -> vector<32x384xf32>
    %c0_10 = arith.constant 0 : index
    %c0_11 = arith.constant 0 : index
    %32 = vector.load %arg5[%c0_10, %c0_11] : memref<32x1xf32, #tpu.memory_space<vmem>>, vector<32x1xf32>
    %33 = vector.broadcast %32 : vector<32x1xf32> to vector<32x384xf32>
    %34 = arith.addf %31, %33 : vector<32x384xf32>
    %cst_12 = arith.constant 0.000000e+00 : f32
    %35 = vector.broadcast %cst_12 : f32 to vector<32x384xf32>
    %36 = arith.maximumf %34, %35 : vector<32x384xf32>
    %c0_13 = arith.constant 0 : index
    %c0_14 = arith.constant 0 : index
    %37 = vector.load %arg8[%c0_13, %c0_14] : memref<1x384xf32, #tpu.memory_space<vmem>>, vector<1x384xf32>
    %38 = vector.broadcast %37 : vector<1x384xf32> to vector<32x384xf32>
    %39 = arith.mulf %36, %38 : vector<32x384xf32>
    %40 = arith.truncf %39 : vector<32x384xf32> to vector<32x384xbf16>
    %cst_15 = arith.constant 0.000000e+00 : bf16
    %41 = vector.broadcast %cst_15 : bf16 to vector<32x50xbf16>
    %42 = tpu.concatenate %41, %40, %41 in 1 : vector<32x50xbf16>, vector<32x384xbf16>, vector<32x50xbf16> -> vector<32x484xbf16>
    %c0_16 = arith.constant 0 : index
    %c0_17 = arith.constant 0 : index
    %43 = vector.load %arg7[%c0_16, %c0_17] : memref<8x1xf32, #tpu.memory_space<vmem>>, vector<8x1xf32>
    %44 = vector.shape_cast %43 : vector<8x1xf32> to vector<8x1xf32>
    %45 = vector.broadcast %44 : vector<8x1xf32> to vector<8x384xf32>
    %46 = vector.extract_strided_slice %42 {offsets = [0, 0], sizes = [32, 384], strides = [1, 1]} : vector<32x484xbf16> to vector<32x384xbf16>
    %47 = vector.extract_strided_slice %42 {offsets = [0, 1], sizes = [32, 384], strides = [1, 1]} : vector<32x484xbf16> to vector<32x384xbf16>
    %48 = vector.extract_strided_slice %42 {offsets = [0, 2], sizes = [32, 384], strides = [1, 1]} : vector<32x484xbf16> to vector<32x384xbf16>
    %49 = vector.extract_strided_slice %42 {offsets = [0, 3], sizes = [32, 384], strides = [1, 1]} : vector<32x484xbf16> to vector<32x384xbf16>
    %50 = vector.extract_strided_slice %42 {offsets = [0, 4], sizes = [32, 384], strides = [1, 1]} : vector<32x484xbf16> to vector<32x384xbf16>
    %51 = tpu.concatenate %46, %47, %48, %49, %50 in 0 : vector<32x384xbf16>, vector<32x384xbf16>, vector<32x384xbf16>, vector<32x384xbf16>, vector<32x384xbf16> -> vector<160x384xbf16>
    %c0_18 = arith.constant 0 : index
    %c0_19 = arith.constant 0 : index
    %52 = vector.load %arg6[%c0_18, %c0_19] : memref<8x800xbf16, #tpu.memory_space<vmem>>, vector<8x160xbf16>
    %cst_20 = arith.constant dense<0.000000e+00> : vector<8x384xf32>
    %53 = tpu.matmul %52, %51, %cst_20 {dimension_numbers = #tpu.dot_dimension_numbers<[1], [0], [0], [1], [0, 0, 1, 1], [], []>} : vector<8x160xbf16>, vector<160x384xbf16>, vector<8x384xf32> -> vector<8x384xf32>
    %54 = arith.addf %45, %53 : vector<8x384xf32>
    %55 = vector.extract_strided_slice %42 {offsets = [0, 24], sizes = [32, 384], strides = [1, 1]} : vector<32x484xbf16> to vector<32x384xbf16>
    %56 = vector.extract_strided_slice %42 {offsets = [0, 25], sizes = [32, 384], strides = [1, 1]} : vector<32x484xbf16> to vector<32x384xbf16>
    %57 = vector.extract_strided_slice %42 {offsets = [0, 26], sizes = [32, 384], strides = [1, 1]} : vector<32x484xbf16> to vector<32x384xbf16>
    %58 = vector.extract_strided_slice %42 {offsets = [0, 27], sizes = [32, 384], strides = [1, 1]} : vector<32x484xbf16> to vector<32x384xbf16>
    %59 = vector.extract_strided_slice %42 {offsets = [0, 28], sizes = [32, 384], strides = [1, 1]} : vector<32x484xbf16> to vector<32x384xbf16>
    %60 = tpu.concatenate %55, %56, %57, %58, %59 in 0 : vector<32x384xbf16>, vector<32x384xbf16>, vector<32x384xbf16>, vector<32x384xbf16>, vector<32x384xbf16> -> vector<160x384xbf16>
    %c0_21 = arith.constant 0 : index
    %c160 = arith.constant 160 : index
    %61 = vector.load %arg6[%c0_21, %c160] : memref<8x800xbf16, #tpu.memory_space<vmem>>, vector<8x160xbf16>
    %cst_22 = arith.constant dense<0.000000e+00> : vector<8x384xf32>
    %62 = tpu.matmul %61, %60, %cst_22 {dimension_numbers = #tpu.dot_dimension_numbers<[1], [0], [0], [1], [0, 0, 1, 1], [], []>} : vector<8x160xbf16>, vector<160x384xbf16>, vector<8x384xf32> -> vector<8x384xf32>
    %63 = arith.addf %54, %62 : vector<8x384xf32>
    %64 = vector.extract_strided_slice %42 {offsets = [0, 48], sizes = [32, 384], strides = [1, 1]} : vector<32x484xbf16> to vector<32x384xbf16>
    %65 = vector.extract_strided_slice %42 {offsets = [0, 49], sizes = [32, 384], strides = [1, 1]} : vector<32x484xbf16> to vector<32x384xbf16>
    %66 = vector.extract_strided_slice %42 {offsets = [0, 50], sizes = [32, 384], strides = [1, 1]} : vector<32x484xbf16> to vector<32x384xbf16>
    %67 = vector.extract_strided_slice %42 {offsets = [0, 51], sizes = [32, 384], strides = [1, 1]} : vector<32x484xbf16> to vector<32x384xbf16>
    %68 = vector.extract_strided_slice %42 {offsets = [0, 52], sizes = [32, 384], strides = [1, 1]} : vector<32x484xbf16> to vector<32x384xbf16>
    %69 = tpu.concatenate %64, %65, %66, %67, %68 in 0 : vector<32x384xbf16>, vector<32x384xbf16>, vector<32x384xbf16>, vector<32x384xbf16>, vector<32x384xbf16> -> vector<160x384xbf16>
    %c0_23 = arith.constant 0 : index
    %c320 = arith.constant 320 : index
    %70 = vector.load %arg6[%c0_23, %c320] : memref<8x800xbf16, #tpu.memory_space<vmem>>, vector<8x160xbf16>
    %cst_24 = arith.constant dense<0.000000e+00> : vector<8x384xf32>
    %71 = tpu.matmul %70, %69, %cst_24 {dimension_numbers = #tpu.dot_dimension_numbers<[1], [0], [0], [1], [0, 0, 1, 1], [], []>} : vector<8x160xbf16>, vector<160x384xbf16>, vector<8x384xf32> -> vector<8x384xf32>
    %72 = arith.addf %63, %71 : vector<8x384xf32>
    %73 = vector.extract_strided_slice %42 {offsets = [0, 72], sizes = [32, 384], strides = [1, 1]} : vector<32x484xbf16> to vector<32x384xbf16>
    %74 = vector.extract_strided_slice %42 {offsets = [0, 73], sizes = [32, 384], strides = [1, 1]} : vector<32x484xbf16> to vector<32x384xbf16>
    %75 = vector.extract_strided_slice %42 {offsets = [0, 74], sizes = [32, 384], strides = [1, 1]} : vector<32x484xbf16> to vector<32x384xbf16>
    %76 = vector.extract_strided_slice %42 {offsets = [0, 75], sizes = [32, 384], strides = [1, 1]} : vector<32x484xbf16> to vector<32x384xbf16>
    %77 = vector.extract_strided_slice %42 {offsets = [0, 76], sizes = [32, 384], strides = [1, 1]} : vector<32x484xbf16> to vector<32x384xbf16>
    %78 = tpu.concatenate %73, %74, %75, %76, %77 in 0 : vector<32x384xbf16>, vector<32x384xbf16>, vector<32x384xbf16>, vector<32x384xbf16>, vector<32x384xbf16> -> vector<160x384xbf16>
    %c0_25 = arith.constant 0 : index
    %c480 = arith.constant 480 : index
    %79 = vector.load %arg6[%c0_25, %c480] : memref<8x800xbf16, #tpu.memory_space<vmem>>, vector<8x160xbf16>
    %cst_26 = arith.constant dense<0.000000e+00> : vector<8x384xf32>
    %80 = tpu.matmul %79, %78, %cst_26 {dimension_numbers = #tpu.dot_dimension_numbers<[1], [0], [0], [1], [0, 0, 1, 1], [], []>} : vector<8x160xbf16>, vector<160x384xbf16>, vector<8x384xf32> -> vector<8x384xf32>
    %81 = arith.addf %72, %80 : vector<8x384xf32>
    %82 = vector.extract_strided_slice %42 {offsets = [0, 96], sizes = [32, 384], strides = [1, 1]} : vector<32x484xbf16> to vector<32x384xbf16>
    %83 = vector.extract_strided_slice %42 {offsets = [0, 97], sizes = [32, 384], strides = [1, 1]} : vector<32x484xbf16> to vector<32x384xbf16>
    %84 = vector.extract_strided_slice %42 {offsets = [0, 98], sizes = [32, 384], strides = [1, 1]} : vector<32x484xbf16> to vector<32x384xbf16>
    %85 = vector.extract_strided_slice %42 {offsets = [0, 99], sizes = [32, 384], strides = [1, 1]} : vector<32x484xbf16> to vector<32x384xbf16>
    %86 = vector.extract_strided_slice %42 {offsets = [0, 100], sizes = [32, 384], strides = [1, 1]} : vector<32x484xbf16> to vector<32x384xbf16>
    %87 = tpu.concatenate %82, %83, %84, %85, %86 in 0 : vector<32x384xbf16>, vector<32x384xbf16>, vector<32x384xbf16>, vector<32x384xbf16>, vector<32x384xbf16> -> vector<160x384xbf16>
    %c0_27 = arith.constant 0 : index
    %c640 = arith.constant 640 : index
    %88 = vector.load %arg6[%c0_27, %c640] : memref<8x800xbf16, #tpu.memory_space<vmem>>, vector<8x160xbf16>
    %cst_28 = arith.constant dense<0.000000e+00> : vector<8x384xf32>
    %89 = tpu.matmul %88, %87, %cst_28 {dimension_numbers = #tpu.dot_dimension_numbers<[1], [0], [0], [1], [0, 0, 1, 1], [], []>} : vector<8x160xbf16>, vector<160x384xbf16>, vector<8x384xf32> -> vector<8x384xf32>
    %90 = arith.addf %81, %89 : vector<8x384xf32>
    %c0_29 = arith.constant 0 : index
    %c0_30 = arith.constant 0 : index
    %c0_31 = arith.constant 0 : index
    %91 = vector.load %arg9[%c0_29, %c0_30, %c0_31] : memref<1x8x384xf32, #tpu.memory_space<vmem>>, vector<1x8x384xf32>
    %92 = vector.shape_cast %91 : vector<1x8x384xf32> to vector<8x384xf32>
    %93 = vector.shape_cast %90 : vector<8x384xf32> to vector<1x8x384xf32>
    tpu.vector_store %arg9[%c0_29, %c0_30, %c0_31], %93 {strides = array<i32>} : memref<1x8x384xf32, #tpu.memory_space<vmem>>, vector<1x8x384xf32>,
    return
  }
  func.func @transform_0(%arg0: i32) -> (i32, i32, i32) {
    %c0_i32 = arith.constant 0 : i32
    %c0_i32_0 = arith.constant 0 : i32
    %c0_i32_1 = arith.constant 0 : i32
    return %arg0, %c0_i32, %c0_i32_0 : i32, i32, i32
  }
  func.func @transform_1(%arg0: i32) -> (i32, i32) {
    %c0_i32 = arith.constant 0 : i32
    %c0_i32_0 = arith.constant 0 : i32
    %c0_i32_1 = arith.constant 0 : i32
    return %c0_i32, %c0_i32_0 : i32, i32
  }
  func.func @transform_2(%arg0: i32) -> (i32, i32) {
    %c0_i32 = arith.constant 0 : i32
    %c0_i32_0 = arith.constant 0 : i32
    %c0_i32_1 = arith.constant 0 : i32
    return %c0_i32, %c0_i32_0 : i32, i32
  }
  func.func @transform_3(%arg0: i32) -> (i32, i32) {
    %c0_i32 = arith.constant 0 : i32
    %c0_i32_0 = arith.constant 0 : i32
    %c0_i32_1 = arith.constant 0 : i32
    return %c0_i32, %c0_i32_0 : i32, i32
  }
  func.func @transform_4(%arg0: i32) -> (i32, i32) {
    %c0_i32 = arith.constant 0 : i32
    %c0_i32_0 = arith.constant 0 : i32
    %c0_i32_1 = arith.constant 0 : i32
    return %c0_i32, %c0_i32_0 : i32, i32
  }
  func.func @transform_5(%arg0: i32) -> (i32, i32) {
    %c0_i32 = arith.constant 0 : i32
    %c0_i32_0 = arith.constant 0 : i32
    %c0_i32_1 = arith.constant 0 : i32
    return %c0_i32, %c0_i32_0 : i32, i32
  }
  func.func @transform_6(%arg0: i32) -> (i32, i32) {
    %c0_i32 = arith.constant 0 : i32
    %c0_i32_0 = arith.constant 0 : i32
    %c0_i32_1 = arith.constant 0 : i32
    return %c0_i32, %c0_i32_0 : i32, i32
  }
  func.func @transform_7(%arg0: i32) -> (i32, i32) {
    %c0_i32 = arith.constant 0 : i32
    %c0_i32_0 = arith.constant 0 : i32
    %c0_i32_1 = arith.constant 0 : i32
    return %c0_i32, %c0_i32_0 : i32, i32
  }
  func.func @transform_8(%arg0: i32) -> (i32, i32, i32) {
    %c0_i32 = arith.constant 0 : i32
    %c0_i32_0 = arith.constant 0 : i32
    %c0_i32_1 = arith.constant 0 : i32
    return %arg0, %c0_i32, %c0_i32_0 : i32, i32, i32
  }
}

</mosaic_0001>

<llo_original>
// kernel: edsr_forward.1
$region0: #{edsr_forward.1}
  #allocation0 [shape = 'u32[]', space=smem, size = 0x4, offset = 0x4, fixed_abs, tag = 'smem constant byte address 0x4 - core index']
  #allocation1 [shape = 'u32[72,128]{1,0:T(1,128)}', space=vmem, size = 0x9000, scoped, tag = 'internal scratch']
  %s0 = inlined_call_operand.vmem [shape: bf16[2,3,584], index: 0, kind: input, shape index: {}]
  %s1 = inlined_call_operand.vmem [shape: bf16[64,243], index: 1, kind: input, shape index: {}]
  %s2 = inlined_call_operand.vmem [shape: f32[64,1], index: 2, kind: input, shape index: {}]
  %s3 = inlined_call_operand.vmem [shape: bf16[32,64], index: 3, kind: input, shape index: {}]
  %s4 = inlined_call_operand.vmem [shape: f32[32,1], index: 4, kind: input, shape index: {}]
  %s5 = inlined_call_operand.vmem [shape: bf16[8,800], index: 5, kind: input, shape index: {}]
  %s6 = inlined_call_operand.vmem [shape: f32[8,1], index: 6, kind: input, shape index: {}]
  %s7 = inlined_call_operand.vmem [shape: f32[1,384], index: 7, kind: input, shape index: {}]
  %s8 = inlined_call_operand.vmem [shape: f32[2,8,384], index: 8, kind: output, shape index: {}]
  %s9 = sld [smem:[#allocation0]]
  $region65: #{edsr_forward.1} parent=0
    _
  %s11 = ssub.s32 1, %s9
  %s12 = scalar_select 0, %s11, %s9
  loop: start=0, step=1, limit=4
  $region2: #{edsr_forward.1} parent=0 // loop_pre_header
    _
  $region3: #{edsr_forward.1} parent=0 // loop_header
    %s14 = sphi 0, %s18
    %p15 = scmp.ge.s32.totalorder %s14, 4
    %s24 = sphi 0, %s26
    %s27 = sphi 0, %s24
    %s28 = sphi 0, %s27
    %s44 = sphi 0, %s28
    %s48 = sphi 0, %s48
    %s50 = sphi 0, %s48
    %s51 = sphi 0, %s50
    %s65 = sphi 0, %s51
    %s69 = sphi 0, %s69
    %s71 = sphi 0, %s69
    %s72 = sphi 0, %s71
    %s86 = sphi 0, %s72
    %s90 = sphi 0, %s90
    %s92 = sphi 0, %s90
    %s93 = sphi 0, %s92
    %s107 = sphi 0, %s93
    %s111 = sphi 0, %s111
    %s113 = sphi 0, %s111
    %s114 = sphi 0, %s113
    %s128 = sphi 0, %s114
    %s132 = sphi 0, %s132
    %s134 = sphi 0, %s132
    %s135 = sphi 0, %s134
    %s149 = sphi 0, %s135
    %s153 = sphi 0, %s153
    %s155 = sphi 0, %s153
    %s156 = sphi 0, %s155
    %s170 = sphi 0, %s156
    %s174 = sphi 0, %s174
    %s176 = sphi 0, %s174
    %s177 = sphi 0, %s176
    %s191 = sphi 0, %s177
    %s197 = sphi 0, %s199
    %s200 = sphi 0, %s197
    %s201 = sphi 0, %s200
    %s217 = sphi 0, %s201
  $region4: #{edsr_forward.1} parent=0 // loop_header_branch
    %17 = sbr.rel (%p15) target = $region8
  $region5: #{edsr_forward.1} parent=0 // loop_body
    %s19 = ssub.s32 %s14, 1
    %s20 = ssub.s32 %s14, 2
    %s21 = sadd.s32 %s14, 1
    %s22 = ssub.s32 %s14, %s21
    %p23 = scmp.eq.s32.totalorder %s22, 0
    %s25 = sadd.s32 %s24, 1
    %s26 = scalar_select %p23, %s24, %s25
    %p29 = pneg %p23
    %p30 = scmp.eq.s32.totalorder %s14, 1
    %p31 = por %p29, %p30
    %p32 = scmp.ne.s32.totalorder %s24, %s27
    %p33 = scmp.eq.s32.totalorder %s14, 0
    %p34 = por %p32, %p33
    %p35 = scmp.ne.s32.totalorder %s24, %s27
    %p36 = scmp.eq.s32.totalorder %s19, 1
    %p37 = por %p35, %p36
    %p38 = scmp.ne.s32.totalorder %s27, %s28
    %p39 = scmp.eq.s32.totalorder %s19, 0
    %p40 = por %p38, %p39
    %p41 = scmp.ne.s32.totalorder %s27, %s28
    %p42 = scmp.eq.s32.totalorder %s20, 1
    %p43 = por %p41, %p42
    %p45 = scmp.ne.s32.totalorder %s28, %s44
    %p46 = scmp.eq.s32.totalorder %s20, 0
    %p47 = por %p45, %p46
    %s49 = sadd.s32 %s48, 1
    %p52 = scmp.eq.s32.totalorder %s14, 1
    %p53 = scmp.ne.s32.totalorder %s48, %s50
    %p54 = scmp.eq.s32.totalorder %s14, 0
    %p55 = por %p53, %p54
    %p56 = scmp.ne.s32.totalorder %s48, %s50
    %p57 = scmp.eq.s32.totalorder %s19, 1
    %p58 = por %p56, %p57
    %p59 = scmp.ne.s32.totalorder %s50, %s51
    %p60 = scmp.eq.s32.totalorder %s19, 0
    %p61 = por %p59, %p60
    %p62 = scmp.ne.s32.totalorder %s50, %s51
    %p63 = scmp.eq.s32.totalorder %s20, 1
    %p64 = por %p62, %p63
    %p66 = scmp.ne.s32.totalorder %s51, %s65
    %p67 = scmp.eq.s32.totalorder %s20, 0
    %p68 = por %p66, %p67
    %s70 = sadd.s32 %s69, 1
    %p73 = scmp.eq.s32.totalorder %s14, 1
    %p74 = scmp.ne.s32.totalorder %s69, %s71
    %p75 = scmp.eq.s32.totalorder %s14, 0
    %p76 = por %p74, %p75
    %p77 = scmp.ne.s32.totalorder %s69, %s71
    %p78 = scmp.eq.s32.totalorder %s19, 1
    %p79 = por %p77, %p78
    %p80 = scmp.ne.s32.totalorder %s71, %s72
    %p81 = scmp.eq.s32.totalorder %s19, 0
    %p82 = por %p80, %p81
    %p83 = scmp.ne.s32.totalorder %s71, %s72
    %p84 = scmp.eq.s32.totalorder %s20, 1
    %p85 = por %p83, %p84
    %p87 = scmp.ne.s32.totalorder %s72, %s86
    %p88 = scmp.eq.s32.totalorder %s20, 0
    %p89 = por %p87, %p88
    %s91 = sadd.s32 %s90, 1
    %p94 = scmp.eq.s32.totalorder %s14, 1
    %p95 = scmp.ne.s32.totalorder %s90, %s92
    %p96 = scmp.eq.s32.totalorder %s14, 0
    %p97 = por %p95, %p96
    %p98 = scmp.ne.s32.totalorder %s90, %s92
    %p99 = scmp.eq.s32.totalorder %s19, 1
    %p100 = por %p98, %p99
    %p101 = scmp.ne.s32.totalorder %s92, %s93
    %p102 = scmp.eq.s32.totalorder %s19, 0
    %p103 = por %p101, %p102
    %p104 = scmp.ne.s32.totalorder %s92, %s93
    %p105 = scmp.eq.s32.totalorder %s20, 1
    %p106 = por %p104, %p105
    %p108 = scmp.ne.s32.totalorder %s93, %s107
    %p109 = scmp.eq.s32.totalorder %s20, 0
    %p110 = por %p108, %p109
    %s112 = sadd.s32 %s111, 1
    %p115 = scmp.eq.s32.totalorder %s14, 1
    %p116 = scmp.ne.s32.totalorder %s111, %s113
    %p117 = scmp.eq.s32.totalorder %s14, 0
    %p118 = por %p116, %p117
    %p119 = scmp.ne.s32.totalorder %s111, %s113
    %p120 = scmp.eq.s32.totalorder %s19, 1
    %p121 = por %p119, %p120
    %p122 = scmp.ne.s32.totalorder %s113, %s114
    %p123 = scmp.eq.s32.totalorder %s19, 0
    %p124 = por %p122, %p123
    %p125 = scmp.ne.s32.totalorder %s113, %s114
    %p126 = scmp.eq.s32.totalorder %s20, 1
    %p127 = por %p125, %p126
    %p129 = scmp.ne.s32.totalorder %s114, %s128
    %p130 = scmp.eq.s32.totalorder %s20, 0
    %p131 = por %p129, %p130
    %s133 = sadd.s32 %s132, 1
    %p136 = scmp.eq.s32.totalorder %s14, 1
    %p137 = scmp.ne.s32.totalorder %s132, %s134
    %p138 = scmp.eq.s32.totalorder %s14, 0
    %p139 = por %p137, %p138
    %p140 = scmp.ne.s32.totalorder %s132, %s134
    %p141 = scmp.eq.s32.totalorder %s19, 1
    %p142 = por %p140, %p141
    %p143 = scmp.ne.s32.totalorder %s134, %s135
    %p144 = scmp.eq.s32.totalorder %s19, 0
    %p145 = por %p143, %p144
    %p146 = scmp.ne.s32.totalorder %s134, %s135
    %p147 = scmp.eq.s32.totalorder %s20, 1
    %p148 = por %p146, %p147
    %p150 = scmp.ne.s32.totalorder %s135, %s149
    %p151 = scmp.eq.s32.totalorder %s20, 0
    %p152 = por %p150, %p151
    %s154 = sadd.s32 %s153, 1
    %p157 = scmp.eq.s32.totalorder %s14, 1
    %p158 = scmp.ne.s32.totalorder %s153, %s155
    %p159 = scmp.eq.s32.totalorder %s14, 0
    %p160 = por %p158, %p159
    %p161 = scmp.ne.s32.totalorder %s153, %s155
    %p162 = scmp.eq.s32.totalorder %s19, 1
    %p163 = por %p161, %p162
    %p164 = scmp.ne.s32.totalorder %s155, %s156
    %p165 = scmp.eq.s32.totalorder %s19, 0
    %p166 = por %p164, %p165
    %p167 = scmp.ne.s32.totalorder %s155, %s156
    %p168 = scmp.eq.s32.totalorder %s20, 1
    %p169 = por %p167, %p168
    %p171 = scmp.ne.s32.totalorder %s156, %s170
    %p172 = scmp.eq.s32.totalorder %s20, 0
    %p173 = por %p171, %p172
    %s175 = sadd.s32 %s174, 1
    %p178 = scmp.eq.s32.totalorder %s14, 1
    %p179 = scmp.ne.s32.totalorder %s174, %s176
    %p180 = scmp.eq.s32.totalorder %s14, 0
    %p181 = por %p179, %p180
    %p182 = scmp.ne.s32.totalorder %s174, %s176
    %p183 = scmp.eq.s32.totalorder %s19, 1
    %p184 = por %p182, %p183
    %p185 = scmp.ne.s32.totalorder %s176, %s177
    %p186 = scmp.eq.s32.totalorder %s19, 0
    %p187 = por %p185, %p186
    %p188 = scmp.ne.s32.totalorder %s176, %s177
    %p189 = scmp.eq.s32.totalorder %s20, 1
    %p190 = por %p188, %p189
    %p192 = scmp.ne.s32.totalorder %s177, %s191
    %p193 = scmp.eq.s32.totalorder %s20, 0
    %p194 = por %p192, %p193
    %s195 = ssub.s32 %s14, %s21
    %p196 = scmp.eq.s32.totalorder %s195, 0
    %s198 = sadd.s32 %s197, 1
    %s199 = scalar_select %p196, %s197, %s198
    %p202 = pneg %p196
    %p203 = scmp.eq.s32.totalorder %s14, 1
    %p204 = por %p202, %p203
    %p205 = scmp.ne.s32.totalorder %s197, %s200
    %p206 = scmp.eq.s32.totalorder %s14, 0
    %p207 = por %p205, %p206
    %p208 = scmp.ne.s32.totalorder %s197, %s200
    %p209 = scmp.eq.s32.totalorder %s19, 1
    %p210 = por %p208, %p209
    %p211 = scmp.ne.s32.totalorder %s200, %s201
    %p212 = scmp.eq.s32.totalorder %s19, 0
    %p213 = por %p211, %p212
    %p214 = scmp.ne.s32.totalorder %s200, %s201
    %p215 = scmp.eq.s32.totalorder %s20, 1
    %p216 = por %p214, %p215
    %p218 = scmp.ne.s32.totalorder %s201, %s217
    %p219 = scmp.eq.s32.totalorder %s20, 0
    %p220 = por %p218, %p219
    %p221 = scmp.le.s32.totalorder 1, %s14
    %p222 = scmp.lt.s32.totalorder %s14, 3
    %p223 = pnand %p221, %p222
    %p224 = pneg %p223
    // Predicated region
    $region9: #{edsr_forward.1} parent=5 // pred_check
      _
    $region10: #{edsr_forward.1} parent=5 // pred_check_branch
      %226 = sbr.rel (%p223) target = $region12
    $region11: #{edsr_forward.1} parent=5 // pred_region
      %s227 = ssub.s32 %s14, 1
      // Predicated region
      $region13: #{edsr_forward.1} parent=11 // pred_check
        %p228 = pneg %p61
      $region14: #{edsr_forward.1} parent=11 // pred_check_branch
        %230 = sbr.rel (%p228) target = $region16
      $region15: #{edsr_forward.1} parent=11 // pred_region
        _
      $region16: #{edsr_forward.1} parent=11 // pred_fallthru
        _
      // Predicated region
      $region17: #{edsr_forward.1} parent=11 // pred_check
        %p231 = pneg %p82
      $region18: #{edsr_forward.1} parent=11 // pred_check_branch
        %233 = sbr.rel (%p231) target = $region20
      $region19: #{edsr_forward.1} parent=11 // pred_region
        _
      $region20: #{edsr_forward.1} parent=11 // pred_fallthru
        _
      // Predicated region
      $region21: #{edsr_forward.1} parent=11 // pred_check
        %p234 = pneg %p103
      $region22: #{edsr_forward.1} parent=11 // pred_check_branch
        %236 = sbr.rel (%p234) target = $region24
      $region23: #{edsr_forward.1} parent=11 // pred_region
        _
      $region24: #{edsr_forward.1} parent=11 // pred_fallthru
        _
      // Predicated region
      $region25: #{edsr_forward.1} parent=11 // pred_check
        %p237 = pneg %p124
      $region26: #{edsr_forward.1} parent=11 // pred_check_branch
        %239 = sbr.rel (%p237) target = $region28
      $region27: #{edsr_forward.1} parent=11 // pred_region
        _
      $region28: #{edsr_forward.1} parent=11 // pred_fallthru
        _
      // Predicated region
      $region29: #{edsr_forward.1} parent=11 // pred_check
        %p240 = pneg %p145
      $region30: #{edsr_forward.1} parent=11 // pred_check_branch
        %242 = sbr.rel (%p240) target = $region32
      $region31: #{edsr_forward.1} parent=11 // pred_region
        _
      $region32: #{edsr_forward.1} parent=11 // pred_fallthru
        _
      // Predicated region
      $region33: #{edsr_forward.1} parent=11 // pred_check
        %p243 = pneg %p166
      $region34: #{edsr_forward.1} parent=11 // pred_check_branch
        %245 = sbr.rel (%p243) target = $region36
      $region35: #{edsr_forward.1} parent=11 // pred_region
        _
      $region36: #{edsr_forward.1} parent=11 // pred_fallthru
        _
      // Predicated region
      $region37: #{edsr_forward.1} parent=11 // pred_check
        %p246 = pneg %p187
      $region38: #{edsr_forward.1} parent=11 // pred_check_branch
        %248 = sbr.rel (%p246) target = $region40
      $region39: #{edsr_forward.1} parent=11 // pred_region
        _
      $region40: #{edsr_forward.1} parent=11 // pred_fallthru
        _
    $region12: #{edsr_forward.1} parent=5 // pred_fallthru
      _
    %p249 = scmp.lt.s32.totalorder %s14, 2
    // Predicated region
    $region41: #{edsr_forward.1} parent=5 // pred_check
      %p250 = pneg %p249
    $region42: #{edsr_forward.1} parent=5 // pred_check_branch
      %252 = sbr.rel (%p250) target = $region44
    $region43: #{edsr_forward.1} parent=5 // pred_region
      // Predicated region
      $region45: #{edsr_forward.1} parent=43 // pred_check
        %p253 = pneg %p34
      $region46: #{edsr_forward.1} parent=43 // pred_check_branch
        %255 = sbr.rel (%p253) target = $region48
      $region47: #{edsr_forward.1} parent=43 // pred_region
        %p256 = scmp.lt.s32.totalorder %s14, 1
        %s257 = scalar_select %p256, %s14, 1
        %s258 = smul.addr %s257, 5
        %s259 = smul.addr %s258, 2
        %s260 = scalar_lea.vmem %s0, %s259
      $region48: #{edsr_forward.1} parent=43 // pred_fallthru
        _
    $region44: #{edsr_forward.1} parent=5 // pred_fallthru
      _
    %p261 = scmp.le.s32.totalorder 1, %s14
    %p262 = scmp.lt.s32.totalorder %s14, 3
    %p263 = pnand %p261, %p262
    %p264 = pneg %p263
    // Predicated region
    $region49: #{edsr_forward.1} parent=5 // pred_check
      _
    $region50: #{edsr_forward.1} parent=5 // pred_check_branch
      %266 = sbr.rel (%p263) target = $region52
    $region51: #{edsr_forward.1} parent=5 // pred_region
      %s267 = ssub.s32 %s14, 1
      %p268 = scmp.lt.s32.totalorder %s19, 1
      %s269 = scalar_select %p268, %s19, 1
      %s270 = smul.addr %s269, 5
      %s271 = smul.addr %s270, 2
      %s272 = scalar_lea.vmem %s0, %s271
      %p273 = pneg %p40
      %p274 = pneg %p37
      %p275 = pneg %p61
      %p276 = pneg %p58
      %p277 = pneg %p82
      %p278 = pneg %p79
      %p279 = pneg %p103
      %p280 = pneg %p100
      %p281 = pneg %p124
      %p282 = pneg %p121
      %p283 = pneg %p145
      %p284 = pneg %p142
      %p285 = pneg %p166
      %p286 = pneg %p163
      %p287 = pneg %p187
      %p288 = pneg %p184
      %p289 = pneg %p213
      %p290 = pneg %p210
      %p291 = scmp.lt.s32.totalorder %s19, 1
      %s292 = scalar_select %p291, %s19, 1
      %s293 = smul.addr %s292, 3
      %s294 = smul.addr %s293, 8
      %s295 = scalar_lea.vmem %s8, %s294
      %p296 = scmp.lt.s32.totalorder %s19, 1
      %s297 = scalar_select %p296, %s19, 1
      %s298 = smul.addr %s297, 5
      %s299 = smul.addr %s298, 2
      %s300 = scalar_lea.vmem %s0, %s299
      %p301 = scmp.lt.s32.totalorder %s19, 1
      %s302 = scalar_select %p301, %s19, 1
      %s303 = smul.addr %s302, 3
      %s304 = smul.addr %s303, 8
      %s305 = scalar_lea.vmem %s8, %s304
      %v307 = vld [vmem:[%s300] sm:$0xff]
      %v308 = vld [vmem:[%s300 + $0x8] sm:$0x3]
      %310 = vst [vmem:[#allocation1] ss:$4 sm:$0xff] %v307
      %s312 = scalar_lea.vmem [#allocation1], 32
      %313 = vst [vmem:[%s312] ss:$4 sm:$0xff] %v308
      %v314 = vld.sshfl [vmem:[#allocation1] sm:$0xff pattern:$0x73625140]
      %v315 = vld.sshfl [vmem:[#allocation1 + $0x8] sm:$0xff pattern:$0x73625140]
      %v316 = vld.sshfl [vmem:[#allocation1 + $0x10] sm:$0xff pattern:$0x73625140]
      %v317 = vld.sshfl [vmem:[#allocation1 + $0x18] sm:$0xff pattern:$0x73625140]
      %v318 = vld.sshfl [vmem:[#allocation1 + $0x20] sm:$0xff pattern:$0x73625140]
      %324 = vst [vmem:[#allocation1] ss:$4 sm:$0xff] %v307
      %s325 = scalar_lea.vmem [#allocation1], 32
      %326 = vst [vmem:[%s325] ss:$4 sm:$0xff] %v308
      %v327 = vld.sshfl [vmem:[#allocation1] sm:$0xff pattern:$0x73625140]
      %v328 = vld.sshfl [vmem:[#allocation1 + $0x8] sm:$0xff pattern:$0x73625140]
      %v329 = vld.sshfl [vmem:[#allocation1 + $0x10] sm:$0xff pattern:$0x73625140]
      %v330 = vld.sshfl [vmem:[#allocation1 + $0x18] sm:$0xff pattern:$0x73625140]
      %v331 = vld.sshfl [vmem:[#allocation1 + $0x20] sm:$0xff pattern:$0x73625140]
      %v332 = vshrl.u32 %v327, 16
      %v334 = vrot.slane %v332, 6
      %v335 = vshll.u32 %v327, 16
      %v337 = vrot.slane %v335, 7
      %v338 = vor.u32 %v334, %v337
      %v339 = vshrl.u32 %v328, 16
      %v341 = vrot.slane %v339, 6
      %v342 = vshll.u32 %v328, 16
      %v344 = vrot.slane %v342, 7
      %v345 = vor.u32 %v341, %v344
      %v346 = vshrl.u32 %v329, 16
      %v348 = vrot.slane %v346, 6
      %v349 = vshll.u32 %v329, 16
      %v351 = vrot.slane %v349, 7
      %v352 = vor.u32 %v348, %v351
      %v353 = vshrl.u32 %v330, 16
      %v355 = vrot.slane %v353, 6
      %v356 = vshll.u32 %v330, 16
      %v358 = vrot.slane %v356, 7
      %v359 = vor.u32 %v355, %v358
      %v360 = vshrl.u32 %v331, 16
      %v362 = vrot.slane %v360, 6
      %v363 = vshll.u32 %v331, 16
      %v365 = vrot.slane %v363, 7
      %v366 = vor.u32 %v362, %v365
      %367 = vrot.lane.b32.xlu0 %v338, 127
      %v368 = vpop.permute.xlu0 %367
      %369 = vrot.lane.b32.xlu0 %v345, 127
      %v370 = vpop.permute.xlu0 %369
      %371 = vrot.lane.b32.xlu0 %v352, 127
      %v372 = vpop.permute.xlu0 %371
      %373 = vrot.lane.b32.xlu0 %v359, 127
      %v374 = vpop.permute.xlu0 %373
      %375 = vrot.lane.b32.xlu0 %v366, 127
      %v376 = vpop.permute.xlu0 %375
      %vm377 = vcmask 1039360
      %v378 = vsel %vm377, %v368, %v370
      %v379 = vsel %vm377, %v370, %v372
      %v380 = vsel %vm377, %v372, %v374
      %v381 = vsel %vm377, %v374, %v376
      %387 = vst [vmem:[#allocation1] ss:$4 sm:$0xff] %v307
      %s388 = scalar_lea.vmem [#allocation1], 32
      %389 = vst [vmem:[%s388] ss:$4 sm:$0xff] %v308
      %v390 = vld.sshfl [vmem:[#allocation1] sm:$0xff pattern:$0x73625140]
      %v392 = vld.sshfl [vmem:[#allocation1 + $0x8] sm:$0xff pattern:$0x73625140]
      %v394 = vld.sshfl [vmem:[#allocation1 + $0x10] sm:$0xff pattern:$0x73625140]
      %v396 = vld.sshfl [vmem:[#allocation1 + $0x18] sm:$0xff pattern:$0x73625140]
      %v398 = vld.sshfl [vmem:[#allocation1 + $0x20] sm:$0xff pattern:$0x73625140]
      %v400 = vrot.slane %v390, 5
      %v401 = vrot.slane %v392, 5
      %v402 = vrot.slane %v394, 5
      %v403 = vrot.slane %v396, 5
      %v404 = vrot.slane %v398, 5
      %405 = vrot.lane.b32.xlu0 %v400, 126
      %v406 = vpop.permute.xlu0 %405
      %407 = vrot.lane.b32.xlu0 %v401, 126
      %v408 = vpop.permute.xlu0 %407
      %409 = vrot.lane.b32.xlu0 %v402, 126
      %v410 = vpop.permute.xlu0 %409
      %411 = vrot.lane.b32.xlu0 %v403, 126
      %v412 = vpop.permute.xlu0 %411
      %413 = vrot.lane.b32.xlu0 %v404, 126
      %v414 = vpop.permute.xlu0 %413
      %vm415 = vcmask 1031168
      %v416 = vsel %vm415, %v406, %v408
      %v417 = vsel %vm415, %v408, %v410
      %v418 = vsel %vm415, %v410, %v412
      %v419 = vsel %vm415, %v412, %v414
      %420 = vst [vmem:[#allocation1] ss:$4 sm:$0xff] %v307
      %s421 = scalar_lea.vmem [#allocation1], 32
      %422 = vst [vmem:[%s421] ss:$4 sm:$0xff] %v308
      %v423 = vld.sshfl [vmem:[#allocation1] sm:$0xff pattern:$0x73625140]
      %v424 = vld.sshfl [vmem:[#allocation1 + $0x8] sm:$0xff pattern:$0x73625140]
      %v425 = vld.sshfl [vmem:[#allocation1 + $0x10] sm:$0xff pattern:$0x73625140]
      %v426 = vld.sshfl [vmem:[#allocation1 + $0x18] sm:$0xff pattern:$0x73625140]
      %v427 = vld.sshfl [vmem:[#allocation1 + $0x20] sm:$0xff pattern:$0x73625140]
      %v428 = vshrl.u32 %v423, 16
      %v430 = vrot.slane %v428, 3
      %v431 = vshll.u32 %v423, 16
      %v433 = vrot.slane %v431, 4
      %v434 = vor.u32 %v430, %v433
      %v435 = vshrl.u32 %v424, 16
      %v437 = vrot.slane %v435, 3
      %v438 = vshll.u32 %v424, 16
      %v440 = vrot.slane %v438, 4
      %v441 = vor.u32 %v437, %v440
      %v442 = vshrl.u32 %v425, 16
      %v444 = vrot.slane %v442, 3
      %v445 = vshll.u32 %v425, 16
      %v447 = vrot.slane %v445, 4
      %v448 = vor.u32 %v444, %v447
      %v449 = vshrl.u32 %v426, 16
      %v451 = vrot.slane %v449, 3
      %v452 = vshll.u32 %v426, 16
      %v454 = vrot.slane %v452, 4
      %v455 = vor.u32 %v451, %v454
      %v456 = vshrl.u32 %v427, 16
      %v458 = vrot.slane %v456, 3
      %v459 = vshll.u32 %v427, 16
      %v461 = vrot.slane %v459, 4
      %v462 = vor.u32 %v458, %v461
      %463 = vrot.lane.b32.xlu0 %v434, 125
      %v464 = vpop.permute.xlu0 %463
      %465 = vrot.lane.b32.xlu0 %v441, 125
      %v466 = vpop.permute.xlu0 %465
      %467 = vrot.lane.b32.xlu0 %v448, 125
      %v468 = vpop.permute.xlu0 %467
      %469 = vrot.lane.b32.xlu0 %v455, 125
      %v470 = vpop.permute.xlu0 %469
      %471 = vrot.lane.b32.xlu0 %v462, 125
      %v472 = vpop.permute.xlu0 %471
      %vm473 = vcmask 1022976
      %v474 = vsel %vm473, %v464, %v466
      %v475 = vsel %vm473, %v466, %v468
      %v476 = vsel %vm473, %v468, %v470
      %v477 = vsel %vm473, %v470, %v472
      %s483 = scalar_lea.vmem [#allocation1], 3
      %484 = vst [vmem:[%s483] ss:$4 sm:$0xff] %v307
      %s485 = scalar_lea.vmem [#allocation1], 35
      %486 = vst [vmem:[%s485] ss:$4 sm:$0xff] %v308
      %v487 = vld.sshfl [vmem:[#allocation1] sm:$0xff pattern:$0x73625140]
      %v489 = vld.sshfl [vmem:[#allocation1 + $0x8] sm:$0xff pattern:$0x73625140]
      %v491 = vld.sshfl [vmem:[#allocation1 + $0x10] sm:$0xff pattern:$0x73625140]
      %v493 = vld.sshfl [vmem:[#allocation1 + $0x18] sm:$0xff pattern:$0x73625140]
      %v495 = vld.sshfl [vmem:[#allocation1 + $0x20] sm:$0xff pattern:$0x73625140]
      %497 = vrot.lane.b32.xlu0 %v487, 124
      %v498 = vpop.permute.xlu0 %497
      %499 = vrot.lane.b32.xlu0 %v489, 124
      %v500 = vpop.permute.xlu0 %499
      %501 = vrot.lane.b32.xlu0 %v491, 124
      %v502 = vpop.permute.xlu0 %501
      %503 = vrot.lane.b32.xlu0 %v493, 124
      %v504 = vpop.permute.xlu0 %503
      %505 = vrot.lane.b32.xlu0 %v495, 124
      %v506 = vpop.permute.xlu0 %505
      %vm507 = vcmask 1014784
      %v508 = vsel %vm507, %v498, %v500
      %v509 = vsel %vm507, %v500, %v502
      %v510 = vsel %vm507, %v502, %v504
      %v511 = vsel %vm507, %v504, %v506
      %512 = vst [vmem:[#allocation1] ss:$4 sm:$0xff] %v307
      %s513 = scalar_lea.vmem [#allocation1], 32
      %514 = vst [vmem:[%s513] ss:$4 sm:$0xff] %v308
      %v515 = vld.sshfl [vmem:[#allocation1] sm:$0xff pattern:$0x73625140]
      %v516 = vld.sshfl [vmem:[#allocation1 + $0x8] sm:$0xff pattern:$0x73625140]
      %v517 = vld.sshfl [vmem:[#allocation1 + $0x10] sm:$0xff pattern:$0x73625140]
      %v518 = vld.sshfl [vmem:[#allocation1 + $0x18] sm:$0xff pattern:$0x73625140]
      %v519 = vld.sshfl [vmem:[#allocation1 + $0x20] sm:$0xff pattern:$0x73625140]
      %v520 = vshll.u32 %v515, 16
      %v522 = vrot.slane %v520, 1
      %v523 = vshll.u32 %v516, 16
      %v525 = vrot.slane %v523, 1
      %v526 = vshll.u32 %v517, 16
      %v528 = vrot.slane %v526, 1
      %v529 = vshll.u32 %v518, 16
      %v531 = vrot.slane %v529, 1
      %v532 = vshll.u32 %v519, 16
      %v534 = vrot.slane %v532, 1
      %v535 = vshrl.u32 %v515, 16
      %v537 = vor.u32 %v535, %v522
      %v538 = vshrl.u32 %v516, 16
      %v540 = vor.u32 %v538, %v525
      %v541 = vshrl.u32 %v517, 16
      %v543 = vor.u32 %v541, %v528
      %v544 = vshrl.u32 %v518, 16
      %v546 = vor.u32 %v544, %v531
      %v547 = vshrl.u32 %v519, 16
      %v549 = vor.u32 %v547, %v534
      %550 = vrot.lane.b32.xlu0 %v522, 123
      %v551 = vpop.permute.xlu0 %550
      %552 = vrot.lane.b32.xlu0 %v525, 123
      %v553 = vpop.permute.xlu0 %552
      %554 = vrot.lane.b32.xlu0 %v528, 123
      %v555 = vpop.permute.xlu0 %554
      %556 = vrot.lane.b32.xlu0 %v531, 123
      %v557 = vpop.permute.xlu0 %556
      %558 = vrot.lane.b32.xlu0 %v534, 123
      %v559 = vpop.permute.xlu0 %558
      %560 = vrot.lane.b32.xlu0 %v537, 123
      %v561 = vpop.permute.xlu0 %560
      %562 = vrot.lane.b32.xlu0 %v540, 123
      %v563 = vpop.permute.xlu0 %562
      %564 = vrot.lane.b32.xlu0 %v543, 123
      %v565 = vpop.permute.xlu0 %564
      %566 = vrot.lane.b32.xlu0 %v546, 123
      %v567 = vpop.permute.xlu0 %566
      %568 = vrot.lane.b32.xlu0 %v549, 123
      %v569 = vpop.permute.xlu0 %568
      %vm570 = vcmask 1006592
      %v571 = vsel %vm570, %v551, %v553
      %v572 = vsel %vm570, %v553, %v555
      %v573 = vsel %vm570, %v555, %v557
      %v574 = vsel %vm570, %v557, %v559
      %v575 = vsel %vm570, %v561, %v563
      %v576 = vsel %vm570, %v563, %v565
      %v577 = vsel %vm570, %v565, %v567
      %v578 = vsel %vm570, %v567, %v569
      %584 = vst [vmem:[#allocation1] ss:$4 sm:$0xff] %v307
      %s585 = scalar_lea.vmem [#allocation1], 32
      %586 = vst [vmem:[%s585] ss:$4 sm:$0xff] %v308
      %v587 = vld.sshfl [vmem:[#allocation1] sm:$0xff pattern:$0x73625140]
      %v589 = vld.sshfl [vmem:[#allocation1 + $0x8] sm:$0xff pattern:$0x73625140]
      %v591 = vld.sshfl [vmem:[#allocation1 + $0x10] sm:$0xff pattern:$0x73625140]
      %v593 = vld.sshfl [vmem:[#allocation1 + $0x18] sm:$0xff pattern:$0x73625140]
      %v595 = vld.sshfl [vmem:[#allocation1 + $0x20] sm:$0xff pattern:$0x73625140]
      %v597 = vrot.slane %v587, 7
      %v598 = vrot.slane %v589, 7
      %v599 = vrot.slane %v591, 7
      %v600 = vrot.slane %v593, 7
      %v601 = vrot.slane %v595, 7
      %602 = vrot.lane.b32.xlu0 %v597, 122
      %v603 = vpop.permute.xlu0 %602
      %604 = vrot.lane.b32.xlu0 %v598, 122
      %v605 = vpop.permute.xlu0 %604
      %606 = vrot.lane.b32.xlu0 %v599, 122
      %v607 = vpop.permute.xlu0 %606
      %608 = vrot.lane.b32.xlu0 %v600, 122
      %v609 = vpop.permute.xlu0 %608
      %610 = vrot.lane.b32.xlu0 %v601, 122
      %v611 = vpop.permute.xlu0 %610
      %vm612 = vcmask 998400
      %v613 = vsel %vm612, %v603, %v605
      %v614 = vsel %vm612, %v605, %v607
      %v615 = vsel %vm612, %v607, %v609
      %v616 = vsel %vm612, %v609, %v611
      %617 = vst [vmem:[#allocation1] ss:$4 sm:$0xff] %v307
      %s618 = scalar_lea.vmem [#allocation1], 32
      %619 = vst [vmem:[%s618] ss:$4 sm:$0xff] %v308
      %v620 = vld.sshfl [vmem:[#allocation1] sm:$0xff pattern:$0x73625140]
      %v621 = vld.sshfl [vmem:[#allocation1 + $0x8] sm:$0xff pattern:$0x73625140]
      %v622 = vld.sshfl [vmem:[#allocation1 + $0x10] sm:$0xff pattern:$0x73625140]
      %v623 = vld.sshfl [vmem:[#allocation1 + $0x18] sm:$0xff pattern:$0x73625140]
      %v624 = vld.sshfl [vmem:[#allocation1 + $0x20] sm:$0xff pattern:$0x73625140]
      %v625 = vshrl.u32 %v620, 16
      %v627 = vrot.slane %v625, 5
      %v628 = vshll.u32 %v620, 16
      %v630 = vrot.slane %v628, 6
      %v631 = vor.u32 %v627, %v630
      %v632 = vshrl.u32 %v621, 16
      %v634 = vrot.slane %v632, 5
      %v635 = vshll.u32 %v621, 16
      %v637 = vrot.slane %v635, 6
      %v638 = vor.u32 %v634, %v637
      %v639 = vshrl.u32 %v622, 16
      %v641 = vrot.slane %v639, 5
      %v642 = vshll.u32 %v622, 16
      %v644 = vrot.slane %v642, 6
      %v645 = vor.u32 %v641, %v644
      %v646 = vshrl.u32 %v623, 16
      %v648 = vrot.slane %v646, 5
      %v649 = vshll.u32 %v623, 16
      %v651 = vrot.slane %v649, 6
      %v652 = vor.u32 %v648, %v651
      %v653 = vshrl.u32 %v624, 16
      %v655 = vrot.slane %v653, 5
      %v656 = vshll.u32 %v624, 16
      %v658 = vrot.slane %v656, 6
      %v659 = vor.u32 %v655, %v658
      %660 = vrot.lane.b32.xlu0 %v631, 121
      %v661 = vpop.permute.xlu0 %660
      %662 = vrot.lane.b32.xlu0 %v638, 121
      %v663 = vpop.permute.xlu0 %662
      %664 = vrot.lane.b32.xlu0 %v645, 121
      %v665 = vpop.permute.xlu0 %664
      %666 = vrot.lane.b32.xlu0 %v652, 121
      %v667 = vpop.permute.xlu0 %666
      %668 = vrot.lane.b32.xlu0 %v659, 121
      %v669 = vpop.permute.xlu0 %668
      %vm670 = vcmask 990208
      %v671 = vsel %vm670, %v661, %v663
      %v672 = vsel %vm670, %v663, %v665
      %v673 = vsel %vm670, %v665, %v667
      %v674 = vsel %vm670, %v667, %v669
      %s680 = scalar_lea.vmem [#allocation1], 2
      %681 = vst [vmem:[%s680] ss:$4 sm:$0xff] %v307
      %s682 = scalar_lea.vmem [#allocation1], 34
      %683 = vst [vmem:[%s682] ss:$4 sm:$0xff] %v308
      %v684 = vld.sshfl [vmem:[#allocation1] sm:$0xff pattern:$0x73625140]
      %v686 = vld.sshfl [vmem:[#allocation1 + $0x8] sm:$0xff pattern:$0x73625140]
      %v688 = vld.sshfl [vmem:[#allocation1 + $0x10] sm:$0xff pattern:$0x73625140]
      %v690 = vld.sshfl [vmem:[#allocation1 + $0x18] sm:$0xff pattern:$0x73625140]
      %v692 = vld.sshfl [vmem:[#allocation1 + $0x20] sm:$0xff pattern:$0x73625140]
      %694 = vrot.lane.b32.xlu0 %v684, 120
      %v695 = vpop.permute.xlu0 %694
      %696 = vrot.lane.b32.xlu0 %v686, 120
      %v697 = vpop.permute.xlu0 %696
      %698 = vrot.lane.b32.xlu0 %v688, 120
      %v699 = vpop.permute.xlu0 %698
      %700 = vrot.lane.b32.xlu0 %v690, 120
      %v701 = vpop.permute.xlu0 %700
      %702 = vrot.lane.b32.xlu0 %v692, 120
      %v703 = vpop.permute.xlu0 %702
      %vm704 = vcmask 982016
      %v705 = vsel %vm704, %v695, %v697
      %v706 = vsel %vm704, %v697, %v699
      %v707 = vsel %vm704, %v699, %v701
      %v708 = vsel %vm704, %v701, %v703
      %vm709 = vcmask 1041408
      %vm710 = vsmask.f32 1280
      %vm711 = vmand %vm709, %vm710
      %v712 = vsel %vm711, %v314, %v378
      %v713 = vsel %vm711, %v315, %v379
      %v714 = vsel %vm711, %v316, %v380
      %v715 = vsel %vm711, %v317, %v381
      %v716 = vsel %vm711, %v318, %v376
      %vm717 = vcmask 1042432
      %v720 = vsel %vm717, %v712, %v416
      %v724 = vsel %vm717, %v713, %v417
      %v728 = vsel %vm717, %v714, %v418
      %v732 = vsel %vm717, %v715, %v419
      %v736 = vsel %vm717, %v716, %v414
      %vm738 = vcmask 1044480
      %vm739 = vsmask.f32 4352
      %vm740 = vmand %vm738, %vm739
      %v741 = vsel %vm740, %v720, %v474
      %v742 = vsel %vm740, %v724, %v475
      %v743 = vsel %vm740, %v728, %v476
      %v744 = vsel %vm740, %v732, %v477
      %v745 = vsel %vm740, %v736, %v472
      %vm746 = vcmask 1045504
      %v749 = vsel %vm746, %v741, %v508
      %v753 = vsel %vm746, %v742, %v509
      %v757 = vsel %vm746, %v743, %v510
      %v761 = vsel %vm746, %v744, %v511
      %v765 = vsel %vm746, %v745, %v506
      %vm767 = vcmask 1047552
      %vm768 = vsmask.f32 7424
      %vm769 = vmand %vm767, %vm768
      %v770 = vsel %vm769, %v749, %v571
      %v771 = vsel %vm769, %v753, %v572
      %v772 = vsel %vm769, %v757, %v573
      %v773 = vsel %vm769, %v761, %v574
      %v774 = vsel %vm769, %v765, %v559
      %vm775 = vcmask 1040384
      %v778 = vsel %vm775, %v575, %v613
      %v782 = vsel %vm775, %v576, %v614
      %v786 = vsel %vm775, %v577, %v615
      %v790 = vsel %vm775, %v578, %v616
      %v794 = vsel %vm775, %v569, %v611
      %vm796 = vcmask 1042432
      %vm797 = vsmask.f32 2304
      %vm798 = vmand %vm796, %vm797
      %v799 = vsel %vm798, %v778, %v671
      %v800 = vsel %vm798, %v782, %v672
      %v801 = vsel %vm798, %v786, %v673
      %v802 = vsel %vm798, %v790, %v674
      %v803 = vsel %vm798, %v794, %v669
      %vm804 = vcmask 1043456
      %v807 = vsel %vm804, %v799, %v705
      %v811 = vsel %vm804, %v800, %v706
      %v815 = vsel %vm804, %v801, %v707
      %v819 = vsel %vm804, %v802, %v708
      %v822 = vsel %vm804, %v803, %v703
      %vm823 = vsmask.f32 5376
      %v825 = vshrl.u32 %v770, 16
      %v827 = vrot.slane %v825, 2
      %v828 = vshll.u32 %v770, 16
      %v830 = vrot.slane %v828, 3
      %v831 = vor.u32 %v827, %v830
      %v833 = vshrl.u32 %v771, 16
      %v835 = vrot.slane %v833, 2
      %v836 = vshll.u32 %v771, 16
      %v838 = vrot.slane %v836, 3
      %v839 = vor.u32 %v835, %v838
      %v841 = vshrl.u32 %v772, 16
      %v843 = vrot.slane %v841, 2
      %v844 = vshll.u32 %v772, 16
      %v846 = vrot.slane %v844, 3
      %v847 = vor.u32 %v843, %v846
      %v849 = vshrl.u32 %v773, 16
      %v851 = vrot.slane %v849, 2
      %v852 = vshll.u32 %v773, 16
      %v854 = vrot.slane %v852, 3
      %v855 = vor.u32 %v851, %v854
      %v856 = vshrl.u32 %v807, 16
      %v858 = vrot.slane %v856, 2
      %v859 = vshll.u32 %v807, 16
      %v861 = vrot.slane %v859, 3
      %v862 = vor.u32 %v858, %v861
      %v863 = vsel %vm823, %v831, %v862
      %v864 = vshrl.u32 %v811, 16
      %v866 = vrot.slane %v864, 2
      %v867 = vshll.u32 %v811, 16
      %v869 = vrot.slane %v867, 3
      %v870 = vor.u32 %v866, %v869
      %v871 = vsel %vm823, %v839, %v870
      %v872 = vshrl.u32 %v815, 16
      %v874 = vrot.slane %v872, 2
      %v875 = vshll.u32 %v815, 16
      %v877 = vrot.slane %v875, 3
      %v878 = vor.u32 %v874, %v877
      %v879 = vsel %vm823, %v847, %v878
      %v880 = vshrl.u32 %v819, 16
      %v882 = vrot.slane %v880, 2
      %v883 = vshll.u32 %v819, 16
      %v885 = vrot.slane %v883, 3
      %v886 = vor.u32 %v882, %v885
      %v887 = vsel %vm823, %v855, %v886
      %888 = vrot.lane.b32.xlu0 %v831, 104
      %v889 = vpop.permute.xlu0 %888
      %890 = vrot.lane.b32.xlu0 %v839, 104
      %v891 = vpop.permute.xlu0 %890
      %892 = vrot.lane.b32.xlu0 %v847, 104
      %v893 = vpop.permute.xlu0 %892
      %894 = vrot.lane.b32.xlu0 %v855, 104
      %v895 = vpop.permute.xlu0 %894
      %896 = vrot.lane.b32.xlu0 %v863, 104
      %v897 = vpop.permute.xlu0 %896
      %898 = vrot.lane.b32.xlu0 %v871, 104
      %v899 = vpop.permute.xlu0 %898
      %900 = vrot.lane.b32.xlu0 %v879, 104
      %v901 = vpop.permute.xlu0 %900
      %902 = vrot.lane.b32.xlu0 %v887, 104
      %v903 = vpop.permute.xlu0 %902
      %904 = vrot.lane.b32.xlu0 %v862, 104
      %v905 = vpop.permute.xlu0 %904
      %906 = vrot.lane.b32.xlu0 %v870, 104
      %v907 = vpop.permute.xlu0 %906
      %908 = vrot.lane.b32.xlu0 %v878, 104
      %v909 = vpop.permute.xlu0 %908
      %910 = vrot.lane.b32.xlu0 %v886, 104
      %v911 = vpop.permute.xlu0 %910
      %vm912 = vcmask 850944
      %v913 = vsel %vm912, %v889, %v891
      %v914 = vsel %vm912, %v891, %v893
      %v915 = vsel %vm912, %v893, %v895
      %v916 = vsel %vm912, %v897, %v899
      %v917 = vsel %vm912, %v899, %v901
      %v918 = vsel %vm912, %v901, %v903
      %v919 = vsel %vm912, %v905, %v907
      %v920 = vsel %vm912, %v907, %v909
      %v921 = vsel %vm912, %v909, %v911
      %v936 = vrot.slane %v770, 5
      %v937 = vrot.slane %v771, 5
      %v938 = vrot.slane %v772, 5
      %v939 = vrot.slane %v773, 5
      %v940 = vrot.slane %v807, 5
      %v941 = vsel %vm796, %v936, %v940
      %v942 = vrot.slane %v811, 5
      %v943 = vsel %vm796, %v937, %v942
      %v944 = vrot.slane %v815, 5
      %v945 = vsel %vm796, %v938, %v944
      %v946 = vrot.slane %v819, 5
      %v947 = vsel %vm796, %v939, %v946
      %948 = vrot.lane.b32.xlu0 %v936, 80
      %v949 = vpop.permute.xlu0 %948
      %950 = vrot.lane.b32.xlu0 %v937, 80
      %v951 = vpop.permute.xlu0 %950
      %952 = vrot.lane.b32.xlu0 %v938, 80
      %v953 = vpop.permute.xlu0 %952
      %954 = vrot.lane.b32.xlu0 %v939, 80
      %v955 = vpop.permute.xlu0 %954
      %956 = vrot.lane.b32.xlu0 %v941, 80
      %v957 = vpop.permute.xlu0 %956
      %958 = vrot.lane.b32.xlu0 %v943, 80
      %v959 = vpop.permute.xlu0 %958
      %960 = vrot.lane.b32.xlu0 %v945, 80
      %v961 = vpop.permute.xlu0 %960
      %962 = vrot.lane.b32.xlu0 %v947, 80
      %v963 = vpop.permute.xlu0 %962
      %964 = vrot.lane.b32.xlu0 %v940, 80
      %v965 = vpop.permute.xlu0 %964
      %966 = vrot.lane.b32.xlu0 %v942, 80
      %v967 = vpop.permute.xlu0 %966
      %968 = vrot.lane.b32.xlu0 %v944, 80
      %v969 = vpop.permute.xlu0 %968
      %970 = vrot.lane.b32.xlu0 %v946, 80
      %v971 = vpop.permute.xlu0 %970
      %vm972 = vcmask 654336
      %v973 = vsel %vm972, %v949, %v951
      %v974 = vsel %vm972, %v951, %v953
      %v975 = vsel %vm972, %v953, %v955
      %v976 = vsel %vm972, %v957, %v959
      %v977 = vsel %vm972, %v959, %v961
      %v978 = vsel %vm972, %v961, %v963
      %v979 = vsel %vm972, %v965, %v967
      %v980 = vsel %vm972, %v967, %v969
      %v981 = vsel %vm972, %v969, %v971
      %vm988 = vsmask.f32 256
      %v989 = vrot.slane %v825, 7
      %v990 = vor.u32 %v989, %v828
      %v991 = vrot.slane %v833, 7
      %v992 = vor.u32 %v991, %v836
      %v993 = vrot.slane %v841, 7
      %v994 = vor.u32 %v993, %v844
      %v995 = vrot.slane %v849, 7
      %v996 = vor.u32 %v995, %v852
      %v997 = vrot.slane %v856, 7
      %v998 = vor.u32 %v997, %v859
      %v999 = vsel %vm988, %v989, %v998
      %v1000 = vrot.slane %v864, 7
      %v1001 = vor.u32 %v1000, %v867
      %v1002 = vsel %vm988, %v991, %v1001
      %v1003 = vrot.slane %v872, 7
      %v1004 = vor.u32 %v1003, %v875
      %v1005 = vsel %vm988, %v993, %v1004
      %v1006 = vrot.slane %v880, 7
      %v1007 = vor.u32 %v1006, %v883
      %v1008 = vsel %vm988, %v995, %v1007
      %1009 = vrot.lane.b32.xlu0 %v990, 56
      %v1010 = vpop.permute.xlu0 %1009
      %1011 = vrot.lane.b32.xlu0 %v992, 56
      %v1012 = vpop.permute.xlu0 %1011
      %1013 = vrot.lane.b32.xlu0 %v994, 56
      %v1014 = vpop.permute.xlu0 %1013
      %1015 = vrot.lane.b32.xlu0 %v996, 56
      %v1016 = vpop.permute.xlu0 %1015
      %1017 = vrot.lane.b32.xlu0 %v999, 56
      %v1018 = vpop.permute.xlu0 %1017
      %1019 = vrot.lane.b32.xlu0 %v1002, 56
      %v1020 = vpop.permute.xlu0 %1019
      %1021 = vrot.lane.b32.xlu0 %v1005, 56
      %v1022 = vpop.permute.xlu0 %1021
      %1023 = vrot.lane.b32.xlu0 %v1008, 56
      %v1024 = vpop.permute.xlu0 %1023
      %vm1025 = vcmask 457728
      %v1026 = vsel %vm1025, %v1010, %v1012
      %v1027 = vsel %vm1025, %v1012, %v1014
      %v1028 = vsel %vm1025, %v1014, %v1016
      %v1029 = vsel %vm1025, %v1018, %v1020
      %v1030 = vsel %vm1025, %v1020, %v1022
      %v1031 = vsel %vm1025, %v1022, %v1024
      %vm1035 = vcmask 1045504
      %v1036 = vrot.slane %v770, 2
      %v1037 = vrot.slane %v771, 2
      %v1038 = vrot.slane %v772, 2
      %v1039 = vrot.slane %v773, 2
      %v1040 = vrot.slane %v807, 2
      %v1041 = vsel %vm1035, %v1036, %v1040
      %v1042 = vrot.slane %v811, 2
      %v1043 = vsel %vm1035, %v1037, %v1042
      %v1044 = vrot.slane %v815, 2
      %v1045 = vsel %vm1035, %v1038, %v1044
      %v1046 = vrot.slane %v819, 2
      %v1047 = vsel %vm1035, %v1039, %v1046
      %1048 = vrot.lane.b32.xlu0 %v1036, 32
      %v1049 = vpop.permute.xlu0 %1048
      %1050 = vrot.lane.b32.xlu0 %v1037, 32
      %v1051 = vpop.permute.xlu0 %1050
      %1052 = vrot.lane.b32.xlu0 %v1038, 32
      %v1053 = vpop.permute.xlu0 %1052
      %1054 = vrot.lane.b32.xlu0 %v1039, 32
      %v1055 = vpop.permute.xlu0 %1054
      %1056 = vrot.lane.b32.xlu0 %v1041, 32
      %v1057 = vpop.permute.xlu0 %1056
      %1058 = vrot.lane.b32.xlu0 %v1043, 32
      %v1059 = vpop.permute.xlu0 %1058
      %1060 = vrot.lane.b32.xlu0 %v1045, 32
      %v1061 = vpop.permute.xlu0 %1060
      %1062 = vrot.lane.b32.xlu0 %v1047, 32
      %v1063 = vpop.permute.xlu0 %1062
      %1064 = vrot.lane.b32.xlu0 %v1040, 32
      %v1065 = vpop.permute.xlu0 %1064
      %1066 = vrot.lane.b32.xlu0 %v1042, 32
      %v1067 = vpop.permute.xlu0 %1066
      %1068 = vrot.lane.b32.xlu0 %v1044, 32
      %v1069 = vpop.permute.xlu0 %1068
      %1070 = vrot.lane.b32.xlu0 %v1046, 32
      %v1071 = vpop.permute.xlu0 %1070
      %vm1072 = vcmask 261120
      %v1073 = vsel %vm1072, %v1049, %v1051
      %v1074 = vsel %vm1072, %v1051, %v1053
      %v1075 = vsel %vm1072, %v1053, %v1055
      %v1076 = vsel %vm1072, %v1057, %v1059
      %v1077 = vsel %vm1072, %v1059, %v1061
      %v1078 = vsel %vm1072, %v1061, %v1063
      %v1079 = vsel %vm1072, %v1065, %v1067
      %v1080 = vsel %vm1072, %v1067, %v1069
      %v1081 = vsel %vm1072, %v1069, %v1071
      %vm1088 = vsmask.f32 3328
      %v1089 = vrot.slane %v825, 4
      %v1090 = vrot.slane %v828, 5
      %v1091 = vor.u32 %v1089, %v1090
      %v1092 = vrot.slane %v833, 4
      %v1093 = vrot.slane %v836, 5
      %v1094 = vor.u32 %v1092, %v1093
      %v1095 = vrot.slane %v841, 4
      %v1096 = vrot.slane %v844, 5
      %v1097 = vor.u32 %v1095, %v1096
      %v1098 = vrot.slane %v849, 4
      %v1099 = vrot.slane %v852, 5
      %v1100 = vor.u32 %v1098, %v1099
      %v1101 = vrot.slane %v856, 4
      %v1102 = vrot.slane %v859, 5
      %v1103 = vor.u32 %v1101, %v1102
      %v1104 = vsel %vm1088, %v1091, %v1103
      %v1105 = vrot.slane %v864, 4
      %v1106 = vrot.slane %v867, 5
      %v1107 = vor.u32 %v1105, %v1106
      %v1108 = vsel %vm1088, %v1094, %v1107
      %v1109 = vrot.slane %v872, 4
      %v1110 = vrot.slane %v875, 5
      %v1111 = vor.u32 %v1109, %v1110
      %v1112 = vsel %vm1088, %v1097, %v1111
      %v1113 = vrot.slane %v880, 4
      %v1114 = vrot.slane %v883, 5
      %v1115 = vor.u32 %v1113, %v1114
      %v1116 = vsel %vm1088, %v1100, %v1115
      %1117 = vrot.lane.b32.xlu0 %v1091, 8
      %v1118 = vpop.permute.xlu0 %1117
      %1119 = vrot.lane.b32.xlu0 %v1094, 8
      %v1120 = vpop.permute.xlu0 %1119
      %1121 = vrot.lane.b32.xlu0 %v1097, 8
      %v1122 = vpop.permute.xlu0 %1121
      %1123 = vrot.lane.b32.xlu0 %v1100, 8
      %v1124 = vpop.permute.xlu0 %1123
      %1125 = vrot.lane.b32.xlu0 %v1104, 8
      %v1126 = vpop.permute.xlu0 %1125
      %1127 = vrot.lane.b32.xlu0 %v1108, 8
      %v1128 = vpop.permute.xlu0 %1127
      %1129 = vrot.lane.b32.xlu0 %v1112, 8
      %v1130 = vpop.permute.xlu0 %1129
      %1131 = vrot.lane.b32.xlu0 %v1116, 8
      %v1132 = vpop.permute.xlu0 %1131
      %1133 = vrot.lane.b32.xlu0 %v1103, 8
      %v1134 = vpop.permute.xlu0 %1133
      %1135 = vrot.lane.b32.xlu0 %v1107, 8
      %v1136 = vpop.permute.xlu0 %1135
      %1137 = vrot.lane.b32.xlu0 %v1111, 8
      %v1138 = vpop.permute.xlu0 %1137
      %1139 = vrot.lane.b32.xlu0 %v1115, 8
      %v1140 = vpop.permute.xlu0 %1139
      %vm1141 = vcmask 64512
      %v1142 = vsel %vm1141, %v1118, %v1120
      %v1143 = vsel %vm1141, %v1120, %v1122
      %v1144 = vsel %vm1141, %v1122, %v1124
      %v1145 = vsel %vm1141, %v1126, %v1128
      %v1146 = vsel %vm1141, %v1128, %v1130
      %v1147 = vsel %vm1141, %v1130, %v1132
      %v1148 = vsel %vm1141, %v1134, %v1136
      %v1149 = vsel %vm1141, %v1136, %v1138
      %v1150 = vsel %vm1141, %v1138, %v1140
      %vm1159 = vcmask 1040384
      %v1160 = vrot.slane %v771, 7
      %v1161 = vrot.slane %v772, 7
      %v1162 = vrot.slane %v773, 7
      %v1163 = vrot.slane %v774, 7
      %v1164 = vrot.slane %v811, 7
      %v1165 = vsel %vm1159, %v1160, %v1164
      %v1166 = vrot.slane %v815, 7
      %v1167 = vsel %vm1159, %v1161, %v1166
      %v1168 = vrot.slane %v819, 7
      %v1169 = vsel %vm1159, %v1162, %v1168
      %v1170 = vrot.slane %v822, 7
      %v1171 = vsel %vm1159, %v1163, %v1170
      %1172 = vrot.lane.b32.xlu0 %v1160, 112
      %v1173 = vpop.permute.xlu0 %1172
      %1174 = vrot.lane.b32.xlu0 %v1161, 112
      %v1175 = vpop.permute.xlu0 %1174
      %1176 = vrot.lane.b32.xlu0 %v1162, 112
      %v1177 = vpop.permute.xlu0 %1176
      %1178 = vrot.lane.b32.xlu0 %v1163, 112
      %v1179 = vpop.permute.xlu0 %1178
      %1180 = vrot.lane.b32.xlu0 %v1165, 112
      %v1181 = vpop.permute.xlu0 %1180
      %1182 = vrot.lane.b32.xlu0 %v1167, 112
      %v1183 = vpop.permute.xlu0 %1182
      %1184 = vrot.lane.b32.xlu0 %v1169, 112
      %v1185 = vpop.permute.xlu0 %1184
      %1186 = vrot.lane.b32.xlu0 %v1171, 112
      %v1187 = vpop.permute.xlu0 %1186
      %vm1188 = vcmask 916480
      %v1189 = vsel %vm1188, %v1173, %v1175
      %v1190 = vsel %vm1188, %v1175, %v1177
      %v1191 = vsel %vm1188, %v1177, %v1179
      %v1192 = vsel %vm1188, %v1181, %v1183
      %v1193 = vsel %vm1188, %v1183, %v1185
      %v1194 = vsel %vm1188, %v1185, %v1187
      %vm1198 = vsmask.f32 6400
      %v1199 = vrot.slane %v833, 1
      %v1200 = vrot.slane %v836, 2
      %v1201 = vor.u32 %v1199, %v1200
      %v1202 = vrot.slane %v841, 1
      %v1203 = vrot.slane %v844, 2
      %v1204 = vor.u32 %v1202, %v1203
      %v1205 = vrot.slane %v849, 1
      %v1206 = vrot.slane %v852, 2
      %v1207 = vor.u32 %v1205, %v1206
      %v1209 = vshrl.u32 %v774, 16
      %v1211 = vrot.slane %v1209, 1
      %v1212 = vshll.u32 %v774, 16
      %v1214 = vrot.slane %v1212, 2
      %v1215 = vor.u32 %v1211, %v1214
      %v1216 = vrot.slane %v864, 1
      %v1217 = vrot.slane %v867, 2
      %v1218 = vor.u32 %v1216, %v1217
      %v1219 = vsel %vm1198, %v1201, %v1218
      %v1220 = vrot.slane %v872, 1
      %v1221 = vrot.slane %v875, 2
      %v1222 = vor.u32 %v1220, %v1221
      %v1223 = vsel %vm1198, %v1204, %v1222
      %v1224 = vrot.slane %v880, 1
      %v1225 = vrot.slane %v883, 2
      %v1226 = vor.u32 %v1224, %v1225
      %v1227 = vsel %vm1198, %v1207, %v1226
      %v1228 = vshrl.u32 %v822, 16
      %v1230 = vrot.slane %v1228, 1
      %v1231 = vshll.u32 %v822, 16
      %v1233 = vrot.slane %v1231, 2
      %v1234 = vor.u32 %v1230, %v1233
      %v1235 = vsel %vm1198, %v1215, %v1234
      %1236 = vrot.lane.b32.xlu0 %v1201, 88
      %v1237 = vpop.permute.xlu0 %1236
      %1238 = vrot.lane.b32.xlu0 %v1204, 88
      %v1239 = vpop.permute.xlu0 %1238
      %1240 = vrot.lane.b32.xlu0 %v1207, 88
      %v1241 = vpop.permute.xlu0 %1240
      %1242 = vrot.lane.b32.xlu0 %v1215, 88
      %v1243 = vpop.permute.xlu0 %1242
      %1244 = vrot.lane.b32.xlu0 %v1219, 88
      %v1245 = vpop.permute.xlu0 %1244
      %1246 = vrot.lane.b32.xlu0 %v1223, 88
      %v1247 = vpop.permute.xlu0 %1246
      %1248 = vrot.lane.b32.xlu0 %v1227, 88
      %v1249 = vpop.permute.xlu0 %1248
      %1250 = vrot.lane.b32.xlu0 %v1235, 88
      %v1251 = vpop.permute.xlu0 %1250
      %1252 = vrot.lane.b32.xlu0 %v1218, 88
      %v1253 = vpop.permute.xlu0 %1252
      %1254 = vrot.lane.b32.xlu0 %v1222, 88
      %v1255 = vpop.permute.xlu0 %1254
      %1256 = vrot.lane.b32.xlu0 %v1226, 88
      %v1257 = vpop.permute.xlu0 %1256
      %1258 = vrot.lane.b32.xlu0 %v1234, 88
      %v1259 = vpop.permute.xlu0 %1258
      %vm1260 = vcmask 719872
      %v1261 = vsel %vm1260, %v1237, %v1239
      %v1262 = vsel %vm1260, %v1239, %v1241
      %v1263 = vsel %vm1260, %v1241, %v1243
      %v1264 = vsel %vm1260, %v1245, %v1247
      %v1265 = vsel %vm1260, %v1247, %v1249
      %v1266 = vsel %vm1260, %v1249, %v1251
      %v1267 = vsel %vm1260, %v1253, %v1255
      %v1268 = vsel %vm1260, %v1255, %v1257
      %v1269 = vsel %vm1260, %v1257, %v1259
      %vm1276 = vcmask 1043456
      %v1277 = vrot.slane %v771, 4
      %v1278 = vrot.slane %v772, 4
      %v1279 = vrot.slane %v773, 4
      %v1280 = vrot.slane %v774, 4
      %v1281 = vrot.slane %v811, 4
      %v1282 = vsel %vm1276, %v1277, %v1281
      %v1283 = vrot.slane %v815, 4
      %v1284 = vsel %vm1276, %v1278, %v1283
      %v1285 = vrot.slane %v819, 4
      %v1286 = vsel %vm1276, %v1279, %v1285
      %v1287 = vrot.slane %v822, 4
      %v1288 = vsel %vm1276, %v1280, %v1287
      %1289 = vrot.lane.b32.xlu0 %v1277, 64
      %v1290 = vpop.permute.xlu0 %1289
      %1291 = vrot.lane.b32.xlu0 %v1278, 64
      %v1292 = vpop.permute.xlu0 %1291
      %1293 = vrot.lane.b32.xlu0 %v1279, 64
      %v1294 = vpop.permute.xlu0 %1293
      %1295 = vrot.lane.b32.xlu0 %v1280, 64
      %v1296 = vpop.permute.xlu0 %1295
      %1297 = vrot.lane.b32.xlu0 %v1282, 64
      %v1298 = vpop.permute.xlu0 %1297
      %1299 = vrot.lane.b32.xlu0 %v1284, 64
      %v1300 = vpop.permute.xlu0 %1299
      %1301 = vrot.lane.b32.xlu0 %v1286, 64
      %v1302 = vpop.permute.xlu0 %1301
      %1303 = vrot.lane.b32.xlu0 %v1288, 64
      %v1304 = vpop.permute.xlu0 %1303
      %1305 = vrot.lane.b32.xlu0 %v1281, 64
      %v1306 = vpop.permute.xlu0 %1305
      %1307 = vrot.lane.b32.xlu0 %v1283, 64
      %v1308 = vpop.permute.xlu0 %1307
      %1309 = vrot.lane.b32.xlu0 %v1285, 64
      %v1310 = vpop.permute.xlu0 %1309
      %1311 = vrot.lane.b32.xlu0 %v1287, 64
      %v1312 = vpop.permute.xlu0 %1311
      %vm1313 = vcmask 523264
      %v1314 = vsel %vm1313, %v1290, %v1292
      %v1315 = vsel %vm1313, %v1292, %v1294
      %v1316 = vsel %vm1313, %v1294, %v1296
      %v1317 = vsel %vm1313, %v1298, %v1300
      %v1318 = vsel %vm1313, %v1300, %v1302
      %v1319 = vsel %vm1313, %v1302, %v1304
      %v1320 = vsel %vm1313, %v1306, %v1308
      %v1321 = vsel %vm1313, %v1308, %v1310
      %v1322 = vsel %vm1313, %v1310, %v1312
      %vm1326 = vmand %vm1035, %vm823
      %v1327 = vsel %vm1326, %v807, %v913
      %v1328 = vsel %vm1326, %v811, %v914
      %v1329 = vsel %vm1326, %v815, %v915
      %v1332 = vsel %vm717, %v919, %v973
      %v1336 = vsel %vm717, %v920, %v974
      %v1340 = vsel %vm717, %v921, %v975
      %vm1342 = vmand %vm1159, %vm988
      %v1343 = vsel %vm1342, %v979, %v1026
      %v1344 = vsel %vm1342, %v980, %v1027
      %v1345 = vsel %vm1342, %v981, %v1028
      %v1348 = vsel %vm746, %v1029, %v1073
      %v1352 = vsel %vm746, %v1030, %v1074
      %v1356 = vsel %vm746, %v1031, %v1075
      %vm1358 = vmand %vm1276, %vm1088
      %v1359 = vsel %vm1358, %v1079, %v1142
      %v1360 = vsel %vm1358, %v1080, %v1143
      %v1361 = vsel %vm1358, %v1081, %v1144
      %v1364 = vsel %vm775, %v1148, %v1189
      %v1368 = vsel %vm775, %v1149, %v1190
      %v1372 = vsel %vm775, %v1150, %v1191
      %vm1374 = vcmask 1046528
      %vm1375 = vmand %vm1374, %vm1198
      %v1376 = vsel %vm1375, %v1192, %v1261
      %v1377 = vsel %vm1375, %v1193, %v1262
      %v1378 = vsel %vm1375, %v1194, %v1263
      %v1381 = vsel %vm804, %v1267, %v1314
      %v1385 = vsel %vm804, %v1268, %v1315
      %v1389 = vsel %vm804, %v1269, %v1316
      %v1391 = vld [vmem:[%s1] sm:$0xff]
      %v1392 = vld [vmem:[%s1 + $0x8] sm:$0xff]
      %v1393 = vld [vmem:[%s1 + $0x10] sm:$0xff]
      %v1394 = vld [vmem:[%s1 + $0x18] sm:$0xff]
      %v1395 = vld [vmem:[%s1 + $0x20] sm:$0xff]
      %v1396 = vld [vmem:[%s1 + $0x28] sm:$0xff]
      %v1397 = vld [vmem:[%s1 + $0x30] sm:$0xff]
      %v1398 = vld [vmem:[%s1 + $0x38] sm:$0xff]
      %v1399 = vld [vmem:[%s2] sm:$0xff]
      %v1400 = vld [vmem:[%s2 + $0x8] sm:$0xff]
      %v1401 = vld [vmem:[%s2 + $0x10] sm:$0xff]
      %v1402 = vld [vmem:[%s2 + $0x18] sm:$0xff]
      %v1403 = vld [vmem:[%s2 + $0x20] sm:$0xff]
      %v1404 = vld [vmem:[%s2 + $0x28] sm:$0xff]
      %v1405 = vld [vmem:[%s2 + $0x30] sm:$0xff]
      %v1406 = vld [vmem:[%s2 + $0x38] sm:$0xff]
      %1408 = vset.pattern.permute.xlu0 0
      %1409 = vperm.xlu0 %1408, %v1399
      %v1410 = vpop.permute.xlu0 %1409
      %1413 = vset.pattern.permute.xlu0 0
      %1414 = vperm.xlu0 %1413, %v1400
      %v1415 = vpop.permute.xlu0 %1414
      %1418 = vset.pattern.permute.xlu0 0
      %1419 = vperm.xlu0 %1418, %v1401
      %v1420 = vpop.permute.xlu0 %1419
      %1423 = vset.pattern.permute.xlu0 0
      %1424 = vperm.xlu0 %1423, %v1402
      %v1425 = vpop.permute.xlu0 %1424
      %1428 = vset.pattern.permute.xlu0 0
      %1429 = vperm.xlu0 %1428, %v1403
      %v1430 = vpop.permute.xlu0 %1429
      %1433 = vset.pattern.permute.xlu0 0
      %1434 = vperm.xlu0 %1433, %v1404
      %v1435 = vpop.permute.xlu0 %1434
      %1438 = vset.pattern.permute.xlu0 0
      %1439 = vperm.xlu0 %1438, %v1405
      %v1440 = vpop.permute.xlu0 %1439
      %1443 = vset.pattern.permute.xlu0 0
      %1444 = vperm.xlu0 %1443, %v1406
      %v1445 = vpop.permute.xlu0 %1444
      %v1455 = vunpack.c.l.b16 %v1391
      %v1456 = vunpack.c.h.b16 %v1391
      %v1457 = vunpack.c.l.b16 %v1392
      %v1458 = vunpack.c.h.b16 %v1392
      %v1459 = vunpack.c.l.b16 %v1393
      %v1460 = vunpack.c.h.b16 %v1393
      %v1461 = vunpack.c.l.b16 %v1394
      %v1462 = vunpack.c.h.b16 %v1394
      %v1463 = vunpack.c.l.b16 %v1395
      %v1464 = vunpack.c.h.b16 %v1395
      %v1465 = vunpack.c.l.b16 %v1396
      %v1466 = vunpack.c.h.b16 %v1396
      %v1467 = vunpack.c.l.b16 %v1397
      %v1468 = vunpack.c.h.b16 %v1397
      %v1469 = vunpack.c.l.b16 %v1398
      %v1470 = vunpack.c.h.b16 %v1398
      %v1471 = vpack.c.b16 %v1457, %v1455
      %v1472 = vpack.c.b16 %v1458, %v1456
      %v1473 = vpack.c.b16 %v1461, %v1459
      %v1474 = vpack.c.b16 %v1462, %v1460
      %v1475 = vpack.c.b16 %v1465, %v1463
      %v1476 = vpack.c.b16 %v1466, %v1464
      %v1477 = vpack.c.b16 %v1469, %v1467
      %v1478 = vpack.c.b16 %v1470, %v1468
      %vm1483 = vcmask 941056
      %v1485 = vsel %vm1483, %v1472, 0
      %v1488 = vsel %vm1483, %v1474, 0
      %v1491 = vsel %vm1483, %v1476, 0
      %v1494 = vsel %vm1483, %v1478, 0
      %vm1496 = vcmask 1041408
      %v1497 = vsel %vm775, 4294967295, 65535
      %v1498 = vsel %vm1496, %v1497, 0
      %v1500 = vand.u32 %v1320, %v1498
      %v1503 = vand.u32 %v1321, %v1498
      %v1506 = vand.u32 %v1322, %v1498
      %1508 = vmatpush.bf16.msra.mxu0 %v1076
      %1509 = vmatpush.bf16.msra.mxu0 %v1348
      %1510 = vmatpush.bf16.msra.mxu0 %v1343
      %1511 = vmatpush.bf16.msra.mxu0 %v976
      %1512 = vmatpush.bf16.msra.mxu0 %v1332
      %1513 = vmatpush.bf16.msra.mxu0 %v916
      %1514 = vmatpush.bf16.msra.mxu0 %v1327
      %1515 = vmatpush.bf16.msra.mxu0 %v770
      %1516 = vmatmul.bf16.gmra.mxu0 %v1471
      %v1517 = vpop.f32.mrf.mxu0
      %v1518 = vadd.f32 %v1410, %v1517
      %v1519 = vpop.f32.mrf.mxu0
      %v1520 = vadd.f32 %v1415, %v1519
      %1521 = vmatmul.bf16.gmra.mxu0 %v1473
      %v1522 = vpop.f32.mrf.mxu0
      %v1523 = vadd.f32 %v1420, %v1522
      %v1524 = vpop.f32.mrf.mxu0
      %v1525 = vadd.f32 %v1425, %v1524
      %1526 = vmatmul.bf16.gmra.mxu0 %v1475
      %v1527 = vpop.f32.mrf.mxu0
      %v1528 = vadd.f32 %v1430, %v1527
      %v1529 = vpop.f32.mrf.mxu0
      %v1530 = vadd.f32 %v1435, %v1529
      %1531 = vmatmul.bf16.gmra.mxu0 %v1477
      %v1532 = vpop.f32.mrf.mxu0
      %v1533 = vadd.f32 %v1440, %v1532
      %v1534 = vpop.f32.mrf.mxu0
      %v1535 = vadd.f32 %v1445, %v1534
      %1536 = vdwg.mxu0
      %1537 = vmatpush.bf16.msra.mxu0 %v1500
      %1538 = vmatpush.bf16.msra.mxu0 %v1317
      %1539 = vmatpush.bf16.msra.mxu0 %v1381
      %1540 = vmatpush.bf16.msra.mxu0 %v1264
      %1541 = vmatpush.bf16.msra.mxu0 %v1376
      %1542 = vmatpush.bf16.msra.mxu0 %v1364
      %1543 = vmatpush.bf16.msra.mxu0 %v1145
      %1544 = vmatpush.bf16.msra.mxu0 %v1359
      %1545 = vmatmul.bf16.gmra.mxu0 %v1485
      %v1546 = vpop.f32.mrf.mxu0
      %v1547 = vadd.f32 %v1518, %v1546
      %v1548 = vpop.f32.mrf.mxu0
      %v1549 = vadd.f32 %v1520, %v1548
      %1550 = vmatmul.bf16.gmra.mxu0 %v1488
      %v1551 = vpop.f32.mrf.mxu0
      %v1552 = vadd.f32 %v1523, %v1551
      %v1553 = vpop.f32.mrf.mxu0
      %v1554 = vadd.f32 %v1525, %v1553
      %1555 = vmatmul.bf16.gmra.mxu0 %v1491
      %v1556 = vpop.f32.mrf.mxu0
      %v1557 = vadd.f32 %v1528, %v1556
      %v1558 = vpop.f32.mrf.mxu0
      %v1559 = vadd.f32 %v1530, %v1558
      %1560 = vmatmul.bf16.gmra.mxu0 %v1494
      %v1561 = vpop.f32.mrf.mxu0
      %v1562 = vadd.f32 %v1533, %v1561
      %v1563 = vpop.f32.mrf.mxu0
      %v1564 = vadd.f32 %v1535, %v1563
      %1565 = vdwg.mxu0
      %1566 = vmatpush.bf16.msra.mxu0 %v1077
      %1567 = vmatpush.bf16.msra.mxu0 %v1352
      %1568 = vmatpush.bf16.msra.mxu0 %v1344
      %1569 = vmatpush.bf16.msra.mxu0 %v977
      %1570 = vmatpush.bf16.msra.mxu0 %v1336
      %1571 = vmatpush.bf16.msra.mxu0 %v917
      %1572 = vmatpush.bf16.msra.mxu0 %v1328
      %1573 = vmatpush.bf16.msra.mxu0 %v771
      %1574 = vmatmul.bf16.gmra.mxu0 %v1471
      %v1575 = vpop.f32.mrf.mxu0
      %v1576 = vadd.f32 %v1410, %v1575
      %v1577 = vpop.f32.mrf.mxu0
      %v1578 = vadd.f32 %v1415, %v1577
      %1579 = vmatmul.bf16.gmra.mxu0 %v1473
      %v1580 = vpop.f32.mrf.mxu0
      %v1581 = vadd.f32 %v1420, %v1580
      %v1582 = vpop.f32.mrf.mxu0
      %v1583 = vadd.f32 %v1425, %v1582
      %1584 = vmatmul.bf16.gmra.mxu0 %v1475
      %v1585 = vpop.f32.mrf.mxu0
      %v1586 = vadd.f32 %v1430, %v1585
      %v1587 = vpop.f32.mrf.mxu0
      %v1588 = vadd.f32 %v1435, %v1587
      %1589 = vmatmul.bf16.gmra.mxu0 %v1477
      %v1590 = vpop.f32.mrf.mxu0
      %v1591 = vadd.f32 %v1440, %v1590
      %v1592 = vpop.f32.mrf.mxu0
      %v1593 = vadd.f32 %v1445, %v1592
      %1594 = vdwg.mxu0
      %1595 = vmatpush.bf16.msra.mxu0 %v1503
      %1596 = vmatpush.bf16.msra.mxu0 %v1318
      %1597 = vmatpush.bf16.msra.mxu0 %v1385
      %1598 = vmatpush.bf16.msra.mxu0 %v1265
      %1599 = vmatpush.bf16.msra.mxu0 %v1377
      %1600 = vmatpush.bf16.msra.mxu0 %v1368
      %1601 = vmatpush.bf16.msra.mxu0 %v1146
      %1602 = vmatpush.bf16.msra.mxu0 %v1360
      %1603 = vmatmul.bf16.gmra.mxu0 %v1485
      %v1604 = vpop.f32.mrf.mxu0
      %v1605 = vadd.f32 %v1576, %v1604
      %v1606 = vpop.f32.mrf.mxu0
      %v1607 = vadd.f32 %v1578, %v1606
      %1608 = vmatmul.bf16.gmra.mxu0 %v1488
      %v1609 = vpop.f32.mrf.mxu0
      %v1610 = vadd.f32 %v1581, %v1609
      %v1611 = vpop.f32.mrf.mxu0
      %v1612 = vadd.f32 %v1583, %v1611
      %1613 = vmatmul.bf16.gmra.mxu0 %v1491
      %v1614 = vpop.f32.mrf.mxu0
      %v1615 = vadd.f32 %v1586, %v1614
      %v1616 = vpop.f32.mrf.mxu0
      %v1617 = vadd.f32 %v1588, %v1616
      %1618 = vmatmul.bf16.gmra.mxu0 %v1494
      %v1619 = vpop.f32.mrf.mxu0
      %v1620 = vadd.f32 %v1591, %v1619
      %v1621 = vpop.f32.mrf.mxu0
      %v1622 = vadd.f32 %v1593, %v1621
      %1623 = vdwg.mxu0
      %1624 = vmatpush.bf16.msra.mxu0 %v1078
      %1625 = vmatpush.bf16.msra.mxu0 %v1356
      %1626 = vmatpush.bf16.msra.mxu0 %v1345
      %1627 = vmatpush.bf16.msra.mxu0 %v978
      %1628 = vmatpush.bf16.msra.mxu0 %v1340
      %1629 = vmatpush.bf16.msra.mxu0 %v918
      %1630 = vmatpush.bf16.msra.mxu0 %v1329
      %1631 = vmatpush.bf16.msra.mxu0 %v772
      %1632 = vmatmul.bf16.gmra.mxu0 %v1471
      %v1633 = vpop.f32.mrf.mxu0
      %v1634 = vadd.f32 %v1410, %v1633
      %v1635 = vpop.f32.mrf.mxu0
      %v1636 = vadd.f32 %v1415, %v1635
      %1637 = vmatmul.bf16.gmra.mxu0 %v1473
      %v1638 = vpop.f32.mrf.mxu0
      %v1639 = vadd.f32 %v1420, %v1638
      %v1640 = vpop.f32.mrf.mxu0
      %v1641 = vadd.f32 %v1425, %v1640
      %1642 = vmatmul.bf16.gmra.mxu0 %v1475
      %v1643 = vpop.f32.mrf.mxu0
      %v1644 = vadd.f32 %v1430, %v1643
      %v1645 = vpop.f32.mrf.mxu0
      %v1646 = vadd.f32 %v1435, %v1645
      %1647 = vmatmul.bf16.gmra.mxu0 %v1477
      %v1648 = vpop.f32.mrf.mxu0
      %v1649 = vadd.f32 %v1440, %v1648
      %v1650 = vpop.f32.mrf.mxu0
      %v1651 = vadd.f32 %v1445, %v1650
      %1652 = vdwg.mxu0
      %1653 = vmatpush.bf16.msra.mxu0 %v1506
      %1654 = vmatpush.bf16.msra.mxu0 %v1319
      %1655 = vmatpush.bf16.msra.mxu0 %v1389
      %1656 = vmatpush.bf16.msra.mxu0 %v1266
      %1657 = vmatpush.bf16.msra.mxu0 %v1378
      %1658 = vmatpush.bf16.msra.mxu0 %v1372
      %1659 = vmatpush.bf16.msra.mxu0 %v1147
      %1660 = vmatpush.bf16.msra.mxu0 %v1361
      %1661 = vmatmul.bf16.gmra.mxu0 %v1485
      %v1662 = vpop.f32.mrf.mxu0
      %v1663 = vadd.f32 %v1634, %v1662
      %v1664 = vpop.f32.mrf.mxu0
      %v1665 = vadd.f32 %v1636, %v1664
      %1666 = vmatmul.bf16.gmra.mxu0 %v1488
      %v1667 = vpop.f32.mrf.mxu0
      %v1668 = vadd.f32 %v1639, %v1667
      %v1669 = vpop.f32.mrf.mxu0
      %v1670 = vadd.f32 %v1641, %v1669
      %1671 = vmatmul.bf16.gmra.mxu0 %v1491
      %v1672 = vpop.f32.mrf.mxu0
      %v1673 = vadd.f32 %v1644, %v1672
      %v1674 = vpop.f32.mrf.mxu0
      %v1675 = vadd.f32 %v1646, %v1674
      %1676 = vmatmul.bf16.gmra.mxu0 %v1494
      %v1677 = vpop.f32.mrf.mxu0
      %v1678 = vadd.f32 %v1649, %v1677
      %v1679 = vpop.f32.mrf.mxu0
      %v1680 = vadd.f32 %v1651, %v1679
      %1681 = vdwg.mxu0
      %v1682 = vmax.f32 %v1547, 0.0
      %v1683 = vmax.f32 %v1605, 0.0
      %v1684 = vmax.f32 %v1663, 0.0
      %v1685 = vmax.f32 %v1549, 0.0
      %v1686 = vmax.f32 %v1607, 0.0
      %v1687 = vmax.f32 %v1665, 0.0
      %v1688 = vmax.f32 %v1552, 0.0
      %v1689 = vmax.f32 %v1610, 0.0
      %v1690 = vmax.f32 %v1668, 0.0
      %v1691 = vmax.f32 %v1554, 0.0
      %v1692 = vmax.f32 %v1612, 0.0
      %v1693 = vmax.f32 %v1670, 0.0
      %v1694 = vmax.f32 %v1557, 0.0
      %v1695 = vmax.f32 %v1615, 0.0
      %v1696 = vmax.f32 %v1673, 0.0
      %v1697 = vmax.f32 %v1559, 0.0
      %v1698 = vmax.f32 %v1617, 0.0
      %v1699 = vmax.f32 %v1675, 0.0
      %v1700 = vmax.f32 %v1562, 0.0
      %v1701 = vmax.f32 %v1620, 0.0
      %v1702 = vmax.f32 %v1678, 0.0
      %v1703 = vmax.f32 %v1564, 0.0
      %v1704 = vmax.f32 %v1622, 0.0
      %v1705 = vmax.f32 %v1680, 0.0
      %v1706 = vld [vmem:[%s3] sm:$0xf]
      %v1707 = vld [vmem:[%s3 + $0x4] sm:$0xf]
      %v1708 = vld [vmem:[%s3 + $0x8] sm:$0xf]
      %v1709 = vld [vmem:[%s3 + $0xc] sm:$0xf]
      %v1710 = vpack.c.bf16 %v1685, %v1682
      %v1711 = vpack.c.bf16 %v1686, %v1683
      %v1712 = vpack.c.bf16 %v1687, %v1684
      %v1713 = vpack.c.bf16 %v1691, %v1688
      %v1714 = vpack.c.bf16 %v1692, %v1689
      %v1715 = vpack.c.bf16 %v1693, %v1690
      %v1716 = vpack.c.bf16 %v1697, %v1694
      %v1717 = vpack.c.bf16 %v1698, %v1695
      %v1718 = vpack.c.bf16 %v1699, %v1696
      %v1719 = vpack.c.bf16 %v1703, %v1700
      %v1720 = vpack.c.bf16 %v1704, %v1701
      %v1721 = vpack.c.bf16 %v1705, %v1702
      %v1722 = vld [vmem:[%s4] sm:$0xff]
      %v1723 = vld [vmem:[%s4 + $0x8] sm:$0xff]
      %v1724 = vld [vmem:[%s4 + $0x10] sm:$0xff]
      %v1725 = vld [vmem:[%s4 + $0x18] sm:$0xff]
      %1727 = vset.pattern.permute.xlu0 0
      %1728 = vperm.xlu0 %1727, %v1722
      %v1729 = vpop.permute.xlu0 %1728
      %1732 = vset.pattern.permute.xlu0 0
      %1733 = vperm.xlu0 %1732, %v1723
      %v1734 = vpop.permute.xlu0 %1733
      %1737 = vset.pattern.permute.xlu0 0
      %1738 = vperm.xlu0 %1737, %v1724
      %v1739 = vpop.permute.xlu0 %1738
      %1742 = vset.pattern.permute.xlu0 0
      %1743 = vperm.xlu0 %1742, %v1725
      %v1744 = vpop.permute.xlu0 %1743
      %v1750 = vunpack.c.l.b16 %v1706
      %v1751 = vunpack.c.l.b16 %v1707
      %v1752 = vunpack.c.l.b16 %v1708
      %v1753 = vunpack.c.l.b16 %v1709
      %v1754 = vpack.c.b16 %v1751, %v1750
      %v1755 = vpack.c.b16 %v1753, %v1752
      %vm1756 = vcmask 523264
      %v1758 = vsel %vm1756, %v1754, 0
      %v1761 = vsel %vm1756, %v1755, 0
      %1763 = vmatpush.bf16.msra.mxu0 0
      %1764 = vmatpush.bf16.msra.mxu0 0
      %1765 = vmatpush.bf16.msra.mxu0 0
      %1766 = vmatpush.bf16.msra.mxu0 0
      %1767 = vmatpush.bf16.msra.mxu0 %v1719
      %1768 = vmatpush.bf16.msra.mxu0 %v1716
      %1769 = vmatpush.bf16.msra.mxu0 %v1713
      %1770 = vmatpush.bf16.msra.mxu0 %v1710
      %1771 = vmatmul.bf16.gmra.mxu0 %v1758
      %v1772 = vpop.f32.mrf.mxu0
      %v1773 = vadd.f32 %v1729, %v1772
      %v1774 = vpop.f32.mrf.mxu0
      %v1775 = vadd.f32 %v1734, %v1774
      %1776 = vmatmul.bf16.gmra.mxu0 %v1761
      %v1777 = vpop.f32.mrf.mxu0
      %v1778 = vadd.f32 %v1739, %v1777
      %v1779 = vpop.f32.mrf.mxu0
      %v1780 = vadd.f32 %v1744, %v1779
      %1781 = vdwg.mxu0
      %1782 = vmatpush.bf16.msra.mxu0 0
      %1783 = vmatpush.bf16.msra.mxu0 0
      %1784 = vmatpush.bf16.msra.mxu0 0
      %1785 = vmatpush.bf16.msra.mxu0 0
      %1786 = vmatpush.bf16.msra.mxu0 %v1720
      %1787 = vmatpush.bf16.msra.mxu0 %v1717
      %1788 = vmatpush.bf16.msra.mxu0 %v1714
      %1789 = vmatpush.bf16.msra.mxu0 %v1711
      %1790 = vmatmul.bf16.gmra.mxu0 %v1758
      %v1791 = vpop.f32.mrf.mxu0
      %v1792 = vadd.f32 %v1729, %v1791
      %v1793 = vpop.f32.mrf.mxu0
      %v1794 = vadd.f32 %v1734, %v1793
      %1795 = vmatmul.bf16.gmra.mxu0 %v1761
      %v1796 = vpop.f32.mrf.mxu0
      %v1797 = vadd.f32 %v1739, %v1796
      %v1798 = vpop.f32.mrf.mxu0
      %v1799 = vadd.f32 %v1744, %v1798
      %1800 = vdwg.mxu0
      %1801 = vmatpush.bf16.msra.mxu0 0
      %1802 = vmatpush.bf16.msra.mxu0 0
      %1803 = vmatpush.bf16.msra.mxu0 0
      %1804 = vmatpush.bf16.msra.mxu0 0
      %1805 = vmatpush.bf16.msra.mxu0 %v1721
      %1806 = vmatpush.bf16.msra.mxu0 %v1718
      %1807 = vmatpush.bf16.msra.mxu0 %v1715
      %1808 = vmatpush.bf16.msra.mxu0 %v1712
      %1809 = vmatmul.bf16.gmra.mxu0 %v1758
      %v1810 = vpop.f32.mrf.mxu0
      %v1811 = vadd.f32 %v1729, %v1810
      %v1812 = vpop.f32.mrf.mxu0
      %v1813 = vadd.f32 %v1734, %v1812
      %1814 = vmatmul.bf16.gmra.mxu0 %v1761
      %v1815 = vpop.f32.mrf.mxu0
      %v1816 = vadd.f32 %v1739, %v1815
      %v1817 = vpop.f32.mrf.mxu0
      %v1818 = vadd.f32 %v1744, %v1817
      %1819 = vdwg.mxu0
      %v1820 = vmax.f32 %v1773, 0.0
      %v1821 = vmax.f32 %v1792, 0.0
      %v1822 = vmax.f32 %v1811, 0.0
      %v1823 = vmax.f32 %v1775, 0.0
      %v1824 = vmax.f32 %v1794, 0.0
      %v1825 = vmax.f32 %v1813, 0.0
      %v1826 = vmax.f32 %v1778, 0.0
      %v1827 = vmax.f32 %v1797, 0.0
      %v1828 = vmax.f32 %v1816, 0.0
      %v1829 = vmax.f32 %v1780, 0.0
      %v1830 = vmax.f32 %v1799, 0.0
      %v1831 = vmax.f32 %v1818, 0.0
      %v1832 = vld [vmem:[%s7] sm:$0x7]
      %v1834 = vperm.slane %v1832, 0
      %v1835 = vperm.slane %v1832, 1
      %v1836 = vperm.slane %v1832, 2
      %v1840 = vmul.f32 %v1820, %v1834
      %v1841 = vmul.f32 %v1821, %v1835
      %v1842 = vmul.f32 %v1822, %v1836
      %v1843 = vmul.f32 %v1823, %v1834
      %v1844 = vmul.f32 %v1824, %v1835
      %v1845 = vmul.f32 %v1825, %v1836
      %v1846 = vmul.f32 %v1826, %v1834
      %v1847 = vmul.f32 %v1827, %v1835
      %v1848 = vmul.f32 %v1828, %v1836
      %v1849 = vmul.f32 %v1829, %v1834
      %v1850 = vmul.f32 %v1830, %v1835
      %v1851 = vmul.f32 %v1831, %v1836
      %v1852 = vpack.c.bf16 %v1841, %v1840
      %v1853 = vpack.c.bf16 %v1842, %v1842
      %v1854 = vpack.c.bf16 %v1844, %v1843
      %v1855 = vpack.c.bf16 %v1845, %v1845
      %v1856 = vpack.c.bf16 %v1847, %v1846
      %v1857 = vpack.c.bf16 %v1848, %v1848
      %v1858 = vpack.c.bf16 %v1850, %v1849
      %v1859 = vpack.c.bf16 %v1851, %v1851
      %v1868 = vunpack.c.l.b16 %v1852
      %v1869 = vunpack.c.h.b16 %v1852
      %v1870 = vunpack.c.l.b16 %v1853
      %v1871 = vunpack.c.l.b16 %v1854
      %v1872 = vunpack.c.h.b16 %v1854
      %v1873 = vunpack.c.l.b16 %v1855
      %v1874 = vunpack.c.l.b16 %v1856
      %v1875 = vunpack.c.h.b16 %v1856
      %v1876 = vunpack.c.l.b16 %v1857
      %v1877 = vunpack.c.l.b16 %v1858
      %v1878 = vunpack.c.h.b16 %v1858
      %v1879 = vunpack.c.l.b16 %v1859
      %v1880 = vpack.c.b16 %v1871, %v1868
      %v1881 = vpack.c.b16 %v1872, %v1869
      %v1882 = vpack.c.b16 %v1873, %v1870
      %v1883 = vpack.c.b16 %v1877, %v1874
      %v1884 = vpack.c.b16 %v1878, %v1875
      %v1885 = vpack.c.b16 %v1879, %v1876
      %1886 = vrot.lane.b32.xlu0 %v1880, 50
      %v1887 = vpop.permute.xlu0 %1886
      %1888 = vrot.lane.b32.xlu0 %v1881, 50
      %v1889 = vpop.permute.xlu0 %1888
      %1890 = vrot.lane.b32.xlu0 %v1882, 50
      %v1891 = vpop.permute.xlu0 %1890
      %1892 = vrot.lane.b32.xlu0 %v1883, 50
      %v1893 = vpop.permute.xlu0 %1892
      %1894 = vrot.lane.b32.xlu0 %v1884, 50
      %v1895 = vpop.permute.xlu0 %1894
      %1896 = vrot.lane.b32.xlu0 %v1885, 50
      %v1897 = vpop.permute.xlu0 %1896
      %vm1898 = vcmask 408576
      %v1899 = vsel %vm1898, %v1887, %v1889
      %v1900 = vsel %vm1898, %v1889, %v1891
      %v1901 = vsel %vm1898, %v1893, %v1895
      %v1902 = vsel %vm1898, %v1895, %v1897
      %vm1907 = vcmask 408576
      %v1910 = vsel %vm1907, 0, %v1887
      %v1913 = vsel %vm1907, 0, %v1893
      %v1916 = vsel %vm1907, %v1891, 0
      %v1918 = vsel %vm1907, %v1897, 0
      %v1919 = vld [vmem:[%s6] sm:$0xff]
      %1921 = vset.pattern.permute.xlu0 0
      %1922 = vperm.xlu0 %1921, %v1919
      %v1923 = vpop.permute.xlu0 %1922
      %1929 = vrot.lane.b32.xlu0 %v1910, 127
      %v1930 = vpop.permute.xlu0 %1929
      %1931 = vrot.lane.b32.xlu0 %v1899, 127
      %v1932 = vpop.permute.xlu0 %1931
      %1933 = vrot.lane.b32.xlu0 %v1900, 127
      %v1934 = vpop.permute.xlu0 %1933
      %1935 = vrot.lane.b32.xlu0 %v1916, 127
      %v1936 = vpop.permute.xlu0 %1935
      %1937 = vrot.lane.b32.xlu0 %v1913, 127
      %v1938 = vpop.permute.xlu0 %1937
      %1939 = vrot.lane.b32.xlu0 %v1901, 127
      %v1940 = vpop.permute.xlu0 %1939
      %1941 = vrot.lane.b32.xlu0 %v1902, 127
      %v1942 = vpop.permute.xlu0 %1941
      %1943 = vrot.lane.b32.xlu0 %v1918, 127
      %v1944 = vpop.permute.xlu0 %1943
      %v1945 = vsel %vm377, %v1930, %v1932
      %v1946 = vsel %vm377, %v1932, %v1934
      %v1947 = vsel %vm377, %v1934, %v1936
      %v1948 = vsel %vm377, %v1938, %v1940
      %v1949 = vsel %vm377, %v1940, %v1942
      %v1950 = vsel %vm377, %v1942, %v1944
      %1957 = vrot.lane.b32.xlu0 %v1910, 126
      %v1958 = vpop.permute.xlu0 %1957
      %1959 = vrot.lane.b32.xlu0 %v1899, 126
      %v1960 = vpop.permute.xlu0 %1959
      %1961 = vrot.lane.b32.xlu0 %v1900, 126
      %v1962 = vpop.permute.xlu0 %1961
      %1963 = vrot.lane.b32.xlu0 %v1916, 126
      %v1964 = vpop.permute.xlu0 %1963
      %1965 = vrot.lane.b32.xlu0 %v1913, 126
      %v1966 = vpop.permute.xlu0 %1965
      %1967 = vrot.lane.b32.xlu0 %v1901, 126
      %v1968 = vpop.permute.xlu0 %1967
      %1969 = vrot.lane.b32.xlu0 %v1902, 126
      %v1970 = vpop.permute.xlu0 %1969
      %1971 = vrot.lane.b32.xlu0 %v1918, 126
      %v1972 = vpop.permute.xlu0 %1971
      %v1973 = vsel %vm415, %v1958, %v1960
      %v1974 = vsel %vm415, %v1960, %v1962
      %v1975 = vsel %vm415, %v1962, %v1964
      %v1976 = vsel %vm415, %v1966, %v1968
      %v1977 = vsel %vm415, %v1968, %v1970
      %v1978 = vsel %vm415, %v1970, %v1972
      %1985 = vrot.lane.b32.xlu0 %v1910, 125
      %v1986 = vpop.permute.xlu0 %1985
      %1987 = vrot.lane.b32.xlu0 %v1899, 125
      %v1988 = vpop.permute.xlu0 %1987
      %1989 = vrot.lane.b32.xlu0 %v1900, 125
      %v1990 = vpop.permute.xlu0 %1989
      %1991 = vrot.lane.b32.xlu0 %v1916, 125
      %v1992 = vpop.permute.xlu0 %1991
      %1993 = vrot.lane.b32.xlu0 %v1913, 125
      %v1994 = vpop.permute.xlu0 %1993
      %1995 = vrot.lane.b32.xlu0 %v1901, 125
      %v1996 = vpop.permute.xlu0 %1995
      %1997 = vrot.lane.b32.xlu0 %v1902, 125
      %v1998 = vpop.permute.xlu0 %1997
      %1999 = vrot.lane.b32.xlu0 %v1918, 125
      %v2000 = vpop.permute.xlu0 %1999
      %v2001 = vsel %vm473, %v1986, %v1988
      %v2002 = vsel %vm473, %v1988, %v1990
      %v2003 = vsel %vm473, %v1990, %v1992
      %v2004 = vsel %vm473, %v1994, %v1996
      %v2005 = vsel %vm473, %v1996, %v1998
      %v2006 = vsel %vm473, %v1998, %v2000
      %2013 = vrot.lane.b32.xlu0 %v1910, 124
      %v2014 = vpop.permute.xlu0 %2013
      %2015 = vrot.lane.b32.xlu0 %v1899, 124
      %v2016 = vpop.permute.xlu0 %2015
      %2017 = vrot.lane.b32.xlu0 %v1900, 124
      %v2018 = vpop.permute.xlu0 %2017
      %2019 = vrot.lane.b32.xlu0 %v1916, 124
      %v2020 = vpop.permute.xlu0 %2019
      %2021 = vrot.lane.b32.xlu0 %v1913, 124
      %v2022 = vpop.permute.xlu0 %2021
      %2023 = vrot.lane.b32.xlu0 %v1901, 124
      %v2024 = vpop.permute.xlu0 %2023
      %2025 = vrot.lane.b32.xlu0 %v1902, 124
      %v2026 = vpop.permute.xlu0 %2025
      %2027 = vrot.lane.b32.xlu0 %v1918, 124
      %v2028 = vpop.permute.xlu0 %2027
      %v2029 = vsel %vm507, %v2014, %v2016
      %v2030 = vsel %vm507, %v2016, %v2018
      %v2031 = vsel %vm507, %v2018, %v2020
      %v2032 = vsel %vm507, %v2022, %v2024
      %v2033 = vsel %vm507, %v2024, %v2026
      %v2034 = vsel %vm507, %v2026, %v2028
      %v2041 = vld [vmem:[%s5] sm:$0xff]
      %v2043 = vunpack.c.l.b16 %v2041
      %v2044 = vunpack.c.h.b16 %v2041
      %v2045 = vpack.c.b16 %v2043, %v2043
      %v2046 = vpack.c.b16 %v2044, %v2044
      %vm2048 = vcmask 261120
      %v2050 = vsel %vm2048, %v2046, 0
      %2052 = vmatpush.bf16.msra.mxu0 %v2004
      %2053 = vmatpush.bf16.msra.mxu0 %v2001
      %2054 = vmatpush.bf16.msra.mxu0 %v1976
      %2055 = vmatpush.bf16.msra.mxu0 %v1973
      %2056 = vmatpush.bf16.msra.mxu0 %v1948
      %2057 = vmatpush.bf16.msra.mxu0 %v1945
      %2058 = vmatpush.bf16.msra.mxu0 %v1913
      %2059 = vmatpush.bf16.msra.mxu0 %v1910
      %2060 = vmatmul.bf16.gmra.mxu0 %v2045
      %v2061 = vpop.f32.mrf.mxu0
      %v2062 = vadd.f32 0.0, %v2061
      %v2063 = vpop.f32.mrf.mxu0
      %2064 = vdwg.mxu0
      %2065 = vmatpush.bf16.msra.mxu0 0
      %2066 = vmatpush.bf16.msra.mxu0 0
      %2067 = vmatpush.bf16.msra.mxu0 0
      %2068 = vmatpush.bf16.msra.mxu0 0
      %2069 = vmatpush.bf16.msra.mxu0 0
      %2070 = vmatpush.bf16.msra.mxu0 0
      %2071 = vmatpush.bf16.msra.mxu0 %v2032
      %2072 = vmatpush.bf16.msra.mxu0 %v2029
      %2073 = vmatmul.bf16.gmra.mxu0 %v2050
      %v2074 = vpop.f32.mrf.mxu0
      %v2075 = vadd.f32 %v2062, %v2074
      %v2076 = vpop.f32.mrf.mxu0
      %2077 = vdwg.mxu0
      %2078 = vmatpush.bf16.msra.mxu0 %v2005
      %2079 = vmatpush.bf16.msra.mxu0 %v2002
      %2080 = vmatpush.bf16.msra.mxu0 %v1977
      %2081 = vmatpush.bf16.msra.mxu0 %v1974
      %2082 = vmatpush.bf16.msra.mxu0 %v1949
      %2083 = vmatpush.bf16.msra.mxu0 %v1946
      %2084 = vmatpush.bf16.msra.mxu0 %v1901
      %2085 = vmatpush.bf16.msra.mxu0 %v1899
      %2086 = vmatmul.bf16.gmra.mxu0 %v2045
      %v2087 = vpop.f32.mrf.mxu0
      %v2088 = vadd.f32 0.0, %v2087
      %v2089 = vpop.f32.mrf.mxu0
      %2090 = vdwg.mxu0
      %2091 = vmatpush.bf16.msra.mxu0 0
      %2092 = vmatpush.bf16.msra.mxu0 0
      %2093 = vmatpush.bf16.msra.mxu0 0
      %2094 = vmatpush.bf16.msra.mxu0 0
      %2095 = vmatpush.bf16.msra.mxu0 0
      %2096 = vmatpush.bf16.msra.mxu0 0
      %2097 = vmatpush.bf16.msra.mxu0 %v2033
      %2098 = vmatpush.bf16.msra.mxu0 %v2030
      %2099 = vmatmul.bf16.gmra.mxu0 %v2050
      %v2100 = vpop.f32.mrf.mxu0
      %v2101 = vadd.f32 %v2088, %v2100
      %v2102 = vpop.f32.mrf.mxu0
      %2103 = vdwg.mxu0
      %2104 = vmatpush.bf16.msra.mxu0 %v2006
      %2105 = vmatpush.bf16.msra.mxu0 %v2003
      %2106 = vmatpush.bf16.msra.mxu0 %v1978
      %2107 = vmatpush.bf16.msra.mxu0 %v1975
      %2108 = vmatpush.bf16.msra.mxu0 %v1950
      %2109 = vmatpush.bf16.msra.mxu0 %v1947
      %2110 = vmatpush.bf16.msra.mxu0 %v1902
      %2111 = vmatpush.bf16.msra.mxu0 %v1900
      %2112 = vmatmul.bf16.gmra.mxu0 %v2045
      %v2113 = vpop.f32.mrf.mxu0
      %v2114 = vadd.f32 0.0, %v2113
      %v2115 = vpop.f32.mrf.mxu0
      %2116 = vdwg.mxu0
      %2117 = vmatpush.bf16.msra.mxu0 0
      %2118 = vmatpush.bf16.msra.mxu0 0
      %2119 = vmatpush.bf16.msra.mxu0 0
      %2120 = vmatpush.bf16.msra.mxu0 0
      %2121 = vmatpush.bf16.msra.mxu0 0
      %2122 = vmatpush.bf16.msra.mxu0 0
      %2123 = vmatpush.bf16.msra.mxu0 %v2034
      %2124 = vmatpush.bf16.msra.mxu0 %v2031
      %2125 = vmatmul.bf16.gmra.mxu0 %v2050
      %v2126 = vpop.f32.mrf.mxu0
      %v2127 = vadd.f32 %v2114, %v2126
      %v2128 = vpop.f32.mrf.mxu0
      %2129 = vdwg.mxu0
      %v2130 = vadd.f32 %v1923, %v2075
      %v2131 = vadd.f32 %v1923, %v2101
      %v2132 = vadd.f32 %v1923, %v2127
      %v2133 = vld [vmem:[%s5 + $0x4] sm:$0xff]
      %v2135 = vunpack.c.l.b16 %v2133
      %v2136 = vunpack.c.h.b16 %v2133
      %v2137 = vpack.c.b16 %v2135, %v2135
      %v2138 = vpack.c.b16 %v2136, %v2136
      %2139 = vrot.lane.b32.xlu0 %v2137, 96
      %v2140 = vpop.permute.xlu0 %2139
      %2141 = vrot.lane.b32.xlu0 %v2138, 96
      %v2142 = vpop.permute.xlu0 %2141
      %vm2143 = vcmask 785408
      %v2144 = vsel %vm2143, %v2140, %v2142
      %2146 = vrot.lane.b32.xlu0 %v1910, 104
      %v2147 = vpop.permute.xlu0 %2146
      %2148 = vrot.lane.b32.xlu0 %v1899, 104
      %v2149 = vpop.permute.xlu0 %2148
      %2150 = vrot.lane.b32.xlu0 %v1900, 104
      %v2151 = vpop.permute.xlu0 %2150
      %2152 = vrot.lane.b32.xlu0 %v1916, 104
      %v2153 = vpop.permute.xlu0 %2152
      %2154 = vrot.lane.b32.xlu0 %v1913, 104
      %v2155 = vpop.permute.xlu0 %2154
      %2156 = vrot.lane.b32.xlu0 %v1901, 104
      %v2157 = vpop.permute.xlu0 %2156
      %2158 = vrot.lane.b32.xlu0 %v1902, 104
      %v2159 = vpop.permute.xlu0 %2158
      %2160 = vrot.lane.b32.xlu0 %v1918, 104
      %v2161 = vpop.permute.xlu0 %2160
      %2162 = vrot.lane.b32.xlu0 %v1945, 104
      %v2163 = vpop.permute.xlu0 %2162
      %2164 = vrot.lane.b32.xlu0 %v1946, 104
      %v2165 = vpop.permute.xlu0 %2164
      %2166 = vrot.lane.b32.xlu0 %v1947, 104
      %v2167 = vpop.permute.xlu0 %2166
      %2168 = vrot.lane.b32.xlu0 %v1936, 104
      %v2169 = vpop.permute.xlu0 %2168
      %2170 = vrot.lane.b32.xlu0 %v1948, 104
      %v2171 = vpop.permute.xlu0 %2170
      %2172 = vrot.lane.b32.xlu0 %v1949, 104
      %v2173 = vpop.permute.xlu0 %2172
      %2174 = vrot.lane.b32.xlu0 %v1950, 104
      %v2175 = vpop.permute.xlu0 %2174
      %2176 = vrot.lane.b32.xlu0 %v1944, 104
      %v2177 = vpop.permute.xlu0 %2176
      %2178 = vrot.lane.b32.xlu0 %v1973, 104
      %v2179 = vpop.permute.xlu0 %2178
      %2180 = vrot.lane.b32.xlu0 %v1974, 104
      %v2181 = vpop.permute.xlu0 %2180
      %2182 = vrot.lane.b32.xlu0 %v1975, 104
      %v2183 = vpop.permute.xlu0 %2182
      %2184 = vrot.lane.b32.xlu0 %v1964, 104
      %v2185 = vpop.permute.xlu0 %2184
      %2186 = vrot.lane.b32.xlu0 %v1976, 104
      %v2187 = vpop.permute.xlu0 %2186
      %2188 = vrot.lane.b32.xlu0 %v1977, 104
      %v2189 = vpop.permute.xlu0 %2188
      %2190 = vrot.lane.b32.xlu0 %v1978, 104
      %v2191 = vpop.permute.xlu0 %2190
      %2192 = vrot.lane.b32.xlu0 %v1972, 104
      %v2193 = vpop.permute.xlu0 %2192
      %2194 = vrot.lane.b32.xlu0 %v2001, 104
      %v2195 = vpop.permute.xlu0 %2194
      %2196 = vrot.lane.b32.xlu0 %v2002, 104
      %v2197 = vpop.permute.xlu0 %2196
      %2198 = vrot.lane.b32.xlu0 %v2003, 104
      %v2199 = vpop.permute.xlu0 %2198
      %2200 = vrot.lane.b32.xlu0 %v1992, 104
      %v2201 = vpop.permute.xlu0 %2200
      %2202 = vrot.lane.b32.xlu0 %v2004, 104
      %v2203 = vpop.permute.xlu0 %2202
      %2204 = vrot.lane.b32.xlu0 %v2005, 104
      %v2205 = vpop.permute.xlu0 %2204
      %2206 = vrot.lane.b32.xlu0 %v2006, 104
      %v2207 = vpop.permute.xlu0 %2206
      %2208 = vrot.lane.b32.xlu0 %v2000, 104
      %v2209 = vpop.permute.xlu0 %2208
      %2210 = vrot.lane.b32.xlu0 %v2029, 104
      %v2211 = vpop.permute.xlu0 %2210
      %2212 = vrot.lane.b32.xlu0 %v2030, 104
      %v2213 = vpop.permute.xlu0 %2212
      %2214 = vrot.lane.b32.xlu0 %v2031, 104
      %v2215 = vpop.permute.xlu0 %2214
      %2216 = vrot.lane.b32.xlu0 %v2020, 104
      %v2217 = vpop.permute.xlu0 %2216
      %2218 = vrot.lane.b32.xlu0 %v2032, 104
      %v2219 = vpop.permute.xlu0 %2218
      %2220 = vrot.lane.b32.xlu0 %v2033, 104
      %v2221 = vpop.permute.xlu0 %2220
      %2222 = vrot.lane.b32.xlu0 %v2034, 104
      %v2223 = vpop.permute.xlu0 %2222
      %2224 = vrot.lane.b32.xlu0 %v2028, 104
      %v2225 = vpop.permute.xlu0 %2224
      %v2226 = vsel %vm912, %v2147, %v2149
      %v2227 = vsel %vm912, %v2149, %v2151
      %v2228 = vsel %vm912, %v2151, %v2153
      %v2229 = vsel %vm912, %v2155, %v2157
      %v2230 = vsel %vm912, %v2157, %v2159
      %v2231 = vsel %vm912, %v2159, %v2161
      %v2232 = vsel %vm912, %v2163, %v2165
      %v2233 = vsel %vm912, %v2165, %v2167
      %v2234 = vsel %vm912, %v2167, %v2169
      %v2235 = vsel %vm912, %v2171, %v2173
      %v2236 = vsel %vm912, %v2173, %v2175
      %v2237 = vsel %vm912, %v2175, %v2177
      %v2238 = vsel %vm912, %v2179, %v2181
      %v2239 = vsel %vm912, %v2181, %v2183
      %v2240 = vsel %vm912, %v2183, %v2185
      %v2241 = vsel %vm912, %v2187, %v2189
      %v2242 = vsel %vm912, %v2189, %v2191
      %v2243 = vsel %vm912, %v2191, %v2193
      %v2244 = vsel %vm912, %v2195, %v2197
      %v2245 = vsel %vm912, %v2197, %v2199
      %v2246 = vsel %vm912, %v2199, %v2201
      %v2247 = vsel %vm912, %v2203, %v2205
      %v2248 = vsel %vm912, %v2205, %v2207
      %v2249 = vsel %vm912, %v2207, %v2209
      %v2250 = vsel %vm912, %v2211, %v2213
      %v2251 = vsel %vm912, %v2213, %v2215
      %v2252 = vsel %vm912, %v2215, %v2217
      %v2253 = vsel %vm912, %v2219, %v2221
      %v2254 = vsel %vm912, %v2221, %v2223
      %v2255 = vsel %vm912, %v2223, %v2225
      %v2287 = vsel %vm2048, %v2142, 0
      %2289 = vmatpush.bf16.msra.mxu0 %v2247
      %2290 = vmatpush.bf16.msra.mxu0 %v2244
      %2291 = vmatpush.bf16.msra.mxu0 %v2241
      %2292 = vmatpush.bf16.msra.mxu0 %v2238
      %2293 = vmatpush.bf16.msra.mxu0 %v2235
      %2294 = vmatpush.bf16.msra.mxu0 %v2232
      %2295 = vmatpush.bf16.msra.mxu0 %v2229
      %2296 = vmatpush.bf16.msra.mxu0 %v2226
      %2297 = vmatmul.bf16.gmra.mxu0 %v2144
      %v2298 = vpop.f32.mrf.mxu0
      %v2299 = vadd.f32 0.0, %v2298
      %v2300 = vpop.f32.mrf.mxu0
      %2301 = vdwg.mxu0
      %2302 = vmatpush.bf16.msra.mxu0 0
      %2303 = vmatpush.bf16.msra.mxu0 0
      %2304 = vmatpush.bf16.msra.mxu0 0
      %2305 = vmatpush.bf16.msra.mxu0 0
      %2306 = vmatpush.bf16.msra.mxu0 0
      %2307 = vmatpush.bf16.msra.mxu0 0
      %2308 = vmatpush.bf16.msra.mxu0 %v2253
      %2309 = vmatpush.bf16.msra.mxu0 %v2250
      %2310 = vmatmul.bf16.gmra.mxu0 %v2287
      %v2311 = vpop.f32.mrf.mxu0
      %v2312 = vadd.f32 %v2299, %v2311
      %v2313 = vpop.f32.mrf.mxu0
      %2314 = vdwg.mxu0
      %2315 = vmatpush.bf16.msra.mxu0 %v2248
      %2316 = vmatpush.bf16.msra.mxu0 %v2245
      %2317 = vmatpush.bf16.msra.mxu0 %v2242
      %2318 = vmatpush.bf16.msra.mxu0 %v2239
      %2319 = vmatpush.bf16.msra.mxu0 %v2236
      %2320 = vmatpush.bf16.msra.mxu0 %v2233
      %2321 = vmatpush.bf16.msra.mxu0 %v2230
      %2322 = vmatpush.bf16.msra.mxu0 %v2227
      %2323 = vmatmul.bf16.gmra.mxu0 %v2144
      %v2324 = vpop.f32.mrf.mxu0
      %v2325 = vadd.f32 0.0, %v2324
      %v2326 = vpop.f32.mrf.mxu0
      %2327 = vdwg.mxu0
      %2328 = vmatpush.bf16.msra.mxu0 0
      %2329 = vmatpush.bf16.msra.mxu0 0
      %2330 = vmatpush.bf16.msra.mxu0 0
      %2331 = vmatpush.bf16.msra.mxu0 0
      %2332 = vmatpush.bf16.msra.mxu0 0
      %2333 = vmatpush.bf16.msra.mxu0 0
      %2334 = vmatpush.bf16.msra.mxu0 %v2254
      %2335 = vmatpush.bf16.msra.mxu0 %v2251
      %2336 = vmatmul.bf16.gmra.mxu0 %v2287
      %v2337 = vpop.f32.mrf.mxu0
      %v2338 = vadd.f32 %v2325, %v2337
      %v2339 = vpop.f32.mrf.mxu0
      %2340 = vdwg.mxu0
      %2341 = vmatpush.bf16.msra.mxu0 %v2249
      %2342 = vmatpush.bf16.msra.mxu0 %v2246
      %2343 = vmatpush.bf16.msra.mxu0 %v2243
      %2344 = vmatpush.bf16.msra.mxu0 %v2240
      %2345 = vmatpush.bf16.msra.mxu0 %v2237
      %2346 = vmatpush.bf16.msra.mxu0 %v2234
      %2347 = vmatpush.bf16.msra.mxu0 %v2231
      %2348 = vmatpush.bf16.msra.mxu0 %v2228
      %2349 = vmatmul.bf16.gmra.mxu0 %v2144
      %v2350 = vpop.f32.mrf.mxu0
      %v2351 = vadd.f32 0.0, %v2350
      %v2352 = vpop.f32.mrf.mxu0
      %2353 = vdwg.mxu0
      %2354 = vmatpush.bf16.msra.mxu0 0
      %2355 = vmatpush.bf16.msra.mxu0 0
      %2356 = vmatpush.bf16.msra.mxu0 0
      %2357 = vmatpush.bf16.msra.mxu0 0
      %2358 = vmatpush.bf16.msra.mxu0 0
      %2359 = vmatpush.bf16.msra.mxu0 0
      %2360 = vmatpush.bf16.msra.mxu0 %v2255
      %2361 = vmatpush.bf16.msra.mxu0 %v2252
      %2362 = vmatmul.bf16.gmra.mxu0 %v2287
      %v2363 = vpop.f32.mrf.mxu0
      %v2364 = vadd.f32 %v2351, %v2363
      %v2365 = vpop.f32.mrf.mxu0
      %2366 = vdwg.mxu0
      %v2367 = vadd.f32 %v2130, %v2312
      %v2368 = vadd.f32 %v2131, %v2338
      %v2369 = vadd.f32 %v2132, %v2364
      %v2370 = vld [vmem:[%s5 + $0x8] sm:$0xff]
      %v2372 = vunpack.c.l.b16 %v2370
      %v2373 = vunpack.c.h.b16 %v2370
      %v2374 = vpack.c.b16 %v2372, %v2372
      %v2375 = vpack.c.b16 %v2373, %v2373
      %2376 = vrot.lane.b32.xlu0 %v2374, 64
      %v2377 = vpop.permute.xlu0 %2376
      %2378 = vrot.lane.b32.xlu0 %v2375, 64
      %v2379 = vpop.permute.xlu0 %2378
      %v2380 = vsel %vm1313, %v2377, %v2379
      %2382 = vrot.lane.b32.xlu0 %v1910, 80
      %v2383 = vpop.permute.xlu0 %2382
      %2384 = vrot.lane.b32.xlu0 %v1899, 80
      %v2385 = vpop.permute.xlu0 %2384
      %2386 = vrot.lane.b32.xlu0 %v1900, 80
      %v2387 = vpop.permute.xlu0 %2386
      %2388 = vrot.lane.b32.xlu0 %v1916, 80
      %v2389 = vpop.permute.xlu0 %2388
      %2390 = vrot.lane.b32.xlu0 %v1913, 80
      %v2391 = vpop.permute.xlu0 %2390
      %2392 = vrot.lane.b32.xlu0 %v1901, 80
      %v2393 = vpop.permute.xlu0 %2392
      %2394 = vrot.lane.b32.xlu0 %v1902, 80
      %v2395 = vpop.permute.xlu0 %2394
      %2396 = vrot.lane.b32.xlu0 %v1918, 80
      %v2397 = vpop.permute.xlu0 %2396
      %2398 = vrot.lane.b32.xlu0 %v1945, 80
      %v2399 = vpop.permute.xlu0 %2398
      %2400 = vrot.lane.b32.xlu0 %v1946, 80
      %v2401 = vpop.permute.xlu0 %2400
      %2402 = vrot.lane.b32.xlu0 %v1947, 80
      %v2403 = vpop.permute.xlu0 %2402
      %2404 = vrot.lane.b32.xlu0 %v1936, 80
      %v2405 = vpop.permute.xlu0 %2404
      %2406 = vrot.lane.b32.xlu0 %v1948, 80
      %v2407 = vpop.permute.xlu0 %2406
      %2408 = vrot.lane.b32.xlu0 %v1949, 80
      %v2409 = vpop.permute.xlu0 %2408
      %2410 = vrot.lane.b32.xlu0 %v1950, 80
      %v2411 = vpop.permute.xlu0 %2410
      %2412 = vrot.lane.b32.xlu0 %v1944, 80
      %v2413 = vpop.permute.xlu0 %2412
      %2414 = vrot.lane.b32.xlu0 %v1973, 80
      %v2415 = vpop.permute.xlu0 %2414
      %2416 = vrot.lane.b32.xlu0 %v1974, 80
      %v2417 = vpop.permute.xlu0 %2416
      %2418 = vrot.lane.b32.xlu0 %v1975, 80
      %v2419 = vpop.permute.xlu0 %2418
      %2420 = vrot.lane.b32.xlu0 %v1964, 80
      %v2421 = vpop.permute.xlu0 %2420
      %2422 = vrot.lane.b32.xlu0 %v1976, 80
      %v2423 = vpop.permute.xlu0 %2422
      %2424 = vrot.lane.b32.xlu0 %v1977, 80
      %v2425 = vpop.permute.xlu0 %2424
      %2426 = vrot.lane.b32.xlu0 %v1978, 80
      %v2427 = vpop.permute.xlu0 %2426
      %2428 = vrot.lane.b32.xlu0 %v1972, 80
      %v2429 = vpop.permute.xlu0 %2428
      %2430 = vrot.lane.b32.xlu0 %v2001, 80
      %v2431 = vpop.permute.xlu0 %2430
      %2432 = vrot.lane.b32.xlu0 %v2002, 80
      %v2433 = vpop.permute.xlu0 %2432
      %2434 = vrot.lane.b32.xlu0 %v2003, 80
      %v2435 = vpop.permute.xlu0 %2434
      %2436 = vrot.lane.b32.xlu0 %v1992, 80
      %v2437 = vpop.permute.xlu0 %2436
      %2438 = vrot.lane.b32.xlu0 %v2004, 80
      %v2439 = vpop.permute.xlu0 %2438
      %2440 = vrot.lane.b32.xlu0 %v2005, 80
      %v2441 = vpop.permute.xlu0 %2440
      %2442 = vrot.lane.b32.xlu0 %v2006, 80
      %v2443 = vpop.permute.xlu0 %2442
      %2444 = vrot.lane.b32.xlu0 %v2000, 80
      %v2445 = vpop.permute.xlu0 %2444
      %2446 = vrot.lane.b32.xlu0 %v2029, 80
      %v2447 = vpop.permute.xlu0 %2446
      %2448 = vrot.lane.b32.xlu0 %v2030, 80
      %v2449 = vpop.permute.xlu0 %2448
      %2450 = vrot.lane.b32.xlu0 %v2031, 80
      %v2451 = vpop.permute.xlu0 %2450
      %2452 = vrot.lane.b32.xlu0 %v2020, 80
      %v2453 = vpop.permute.xlu0 %2452
      %2454 = vrot.lane.b32.xlu0 %v2032, 80
      %v2455 = vpop.permute.xlu0 %2454
      %2456 = vrot.lane.b32.xlu0 %v2033, 80
      %v2457 = vpop.permute.xlu0 %2456
      %2458 = vrot.lane.b32.xlu0 %v2034, 80
      %v2459 = vpop.permute.xlu0 %2458
      %2460 = vrot.lane.b32.xlu0 %v2028, 80
      %v2461 = vpop.permute.xlu0 %2460
      %v2462 = vsel %vm972, %v2383, %v2385
      %v2463 = vsel %vm972, %v2385, %v2387
      %v2464 = vsel %vm972, %v2387, %v2389
      %v2465 = vsel %vm972, %v2391, %v2393
      %v2466 = vsel %vm972, %v2393, %v2395
      %v2467 = vsel %vm972, %v2395, %v2397
      %v2468 = vsel %vm972, %v2399, %v2401
      %v2469 = vsel %vm972, %v2401, %v2403
      %v2470 = vsel %vm972, %v2403, %v2405
      %v2471 = vsel %vm972, %v2407, %v2409
      %v2472 = vsel %vm972, %v2409, %v2411
      %v2473 = vsel %vm972, %v2411, %v2413
      %v2474 = vsel %vm972, %v2415, %v2417
      %v2475 = vsel %vm972, %v2417, %v2419
      %v2476 = vsel %vm972, %v2419, %v2421
      %v2477 = vsel %vm972, %v2423, %v2425
      %v2478 = vsel %vm972, %v2425, %v2427
      %v2479 = vsel %vm972, %v2427, %v2429
      %v2480 = vsel %vm972, %v2431, %v2433
      %v2481 = vsel %vm972, %v2433, %v2435
      %v2482 = vsel %vm972, %v2435, %v2437
      %v2483 = vsel %vm972, %v2439, %v2441
      %v2484 = vsel %vm972, %v2441, %v2443
      %v2485 = vsel %vm972, %v2443, %v2445
      %v2486 = vsel %vm972, %v2447, %v2449
      %v2487 = vsel %vm972, %v2449, %v2451
      %v2488 = vsel %vm972, %v2451, %v2453
      %v2489 = vsel %vm972, %v2455, %v2457
      %v2490 = vsel %vm972, %v2457, %v2459
      %v2491 = vsel %vm972, %v2459, %v2461
      %v2523 = vsel %vm2048, %v2379, 0
      %2525 = vmatpush.bf16.msra.mxu0 %v2483
      %2526 = vmatpush.bf16.msra.mxu0 %v2480
      %2527 = vmatpush.bf16.msra.mxu0 %v2477
      %2528 = vmatpush.bf16.msra.mxu0 %v2474
      %2529 = vmatpush.bf16.msra.mxu0 %v2471
      %2530 = vmatpush.bf16.msra.mxu0 %v2468
      %2531 = vmatpush.bf16.msra.mxu0 %v2465
      %2532 = vmatpush.bf16.msra.mxu0 %v2462
      %2533 = vmatmul.bf16.gmra.mxu0 %v2380
      %v2534 = vpop.f32.mrf.mxu0
      %v2535 = vadd.f32 0.0, %v2534
      %v2536 = vpop.f32.mrf.mxu0
      %2537 = vdwg.mxu0
      %2538 = vmatpush.bf16.msra.mxu0 0
      %2539 = vmatpush.bf16.msra.mxu0 0
      %2540 = vmatpush.bf16.msra.mxu0 0
      %2541 = vmatpush.bf16.msra.mxu0 0
      %2542 = vmatpush.bf16.msra.mxu0 0
      %2543 = vmatpush.bf16.msra.mxu0 0
      %2544 = vmatpush.bf16.msra.mxu0 %v2489
      %2545 = vmatpush.bf16.msra.mxu0 %v2486
      %2546 = vmatmul.bf16.gmra.mxu0 %v2523
      %v2547 = vpop.f32.mrf.mxu0
      %v2548 = vadd.f32 %v2535, %v2547
      %v2549 = vpop.f32.mrf.mxu0
      %2550 = vdwg.mxu0
      %2551 = vmatpush.bf16.msra.mxu0 %v2484
      %2552 = vmatpush.bf16.msra.mxu0 %v2481
      %2553 = vmatpush.bf16.msra.mxu0 %v2478
      %2554 = vmatpush.bf16.msra.mxu0 %v2475
      %2555 = vmatpush.bf16.msra.mxu0 %v2472
      %2556 = vmatpush.bf16.msra.mxu0 %v2469
      %2557 = vmatpush.bf16.msra.mxu0 %v2466
      %2558 = vmatpush.bf16.msra.mxu0 %v2463
      %2559 = vmatmul.bf16.gmra.mxu0 %v2380
      %v2560 = vpop.f32.mrf.mxu0
      %v2561 = vadd.f32 0.0, %v2560
      %v2562 = vpop.f32.mrf.mxu0
      %2563 = vdwg.mxu0
      %2564 = vmatpush.bf16.msra.mxu0 0
      %2565 = vmatpush.bf16.msra.mxu0 0
      %2566 = vmatpush.bf16.msra.mxu0 0
      %2567 = vmatpush.bf16.msra.mxu0 0
      %2568 = vmatpush.bf16.msra.mxu0 0
      %2569 = vmatpush.bf16.msra.mxu0 0
      %2570 = vmatpush.bf16.msra.mxu0 %v2490
      %2571 = vmatpush.bf16.msra.mxu0 %v2487
      %2572 = vmatmul.bf16.gmra.mxu0 %v2523
      %v2573 = vpop.f32.mrf.mxu0
      %v2574 = vadd.f32 %v2561, %v2573
      %v2575 = vpop.f32.mrf.mxu0
      %2576 = vdwg.mxu0
      %2577 = vmatpush.bf16.msra.mxu0 %v2485
      %2578 = vmatpush.bf16.msra.mxu0 %v2482
      %2579 = vmatpush.bf16.msra.mxu0 %v2479
      %2580 = vmatpush.bf16.msra.mxu0 %v2476
      %2581 = vmatpush.bf16.msra.mxu0 %v2473
      %2582 = vmatpush.bf16.msra.mxu0 %v2470
      %2583 = vmatpush.bf16.msra.mxu0 %v2467
      %2584 = vmatpush.bf16.msra.mxu0 %v2464
      %2585 = vmatmul.bf16.gmra.mxu0 %v2380
      %v2586 = vpop.f32.mrf.mxu0
      %v2587 = vadd.f32 0.0, %v2586
      %v2588 = vpop.f32.mrf.mxu0
      %2589 = vdwg.mxu0
      %2590 = vmatpush.bf16.msra.mxu0 0
      %2591 = vmatpush.bf16.msra.mxu0 0
      %2592 = vmatpush.bf16.msra.mxu0 0
      %2593 = vmatpush.bf16.msra.mxu0 0
      %2594 = vmatpush.bf16.msra.mxu0 0
      %2595 = vmatpush.bf16.msra.mxu0 0
      %2596 = vmatpush.bf16.msra.mxu0 %v2491
      %2597 = vmatpush.bf16.msra.mxu0 %v2488
      %2598 = vmatmul.bf16.gmra.mxu0 %v2523
      %v2599 = vpop.f32.mrf.mxu0
      %v2600 = vadd.f32 %v2587, %v2599
      %v2601 = vpop.f32.mrf.mxu0
      %2602 = vdwg.mxu0
      %v2603 = vadd.f32 %v2367, %v2548
      %v2604 = vadd.f32 %v2368, %v2574
      %v2605 = vadd.f32 %v2369, %v2600
      %v2606 = vld [vmem:[%s5 + $0xc] sm:$0xff]
      %v2608 = vunpack.c.l.b16 %v2606
      %v2609 = vunpack.c.h.b16 %v2606
      %v2610 = vpack.c.b16 %v2608, %v2608
      %v2611 = vpack.c.b16 %v2609, %v2609
      %2612 = vrot.lane.b32.xlu0 %v2610, 32
      %v2613 = vpop.permute.xlu0 %2612
      %2614 = vrot.lane.b32.xlu0 %v2611, 32
      %v2615 = vpop.permute.xlu0 %2614
      %v2616 = vsel %vm1072, %v2613, %v2615
      %2618 = vrot.lane.b32.xlu0 %v1910, 56
      %v2619 = vpop.permute.xlu0 %2618
      %2620 = vrot.lane.b32.xlu0 %v1899, 56
      %v2621 = vpop.permute.xlu0 %2620
      %2622 = vrot.lane.b32.xlu0 %v1900, 56
      %v2623 = vpop.permute.xlu0 %2622
      %2624 = vrot.lane.b32.xlu0 %v1916, 56
      %v2625 = vpop.permute.xlu0 %2624
      %2626 = vrot.lane.b32.xlu0 %v1913, 56
      %v2627 = vpop.permute.xlu0 %2626
      %2628 = vrot.lane.b32.xlu0 %v1901, 56
      %v2629 = vpop.permute.xlu0 %2628
      %2630 = vrot.lane.b32.xlu0 %v1902, 56
      %v2631 = vpop.permute.xlu0 %2630
      %2632 = vrot.lane.b32.xlu0 %v1918, 56
      %v2633 = vpop.permute.xlu0 %2632
      %2634 = vrot.lane.b32.xlu0 %v1945, 56
      %v2635 = vpop.permute.xlu0 %2634
      %2636 = vrot.lane.b32.xlu0 %v1946, 56
      %v2637 = vpop.permute.xlu0 %2636
      %2638 = vrot.lane.b32.xlu0 %v1947, 56
      %v2639 = vpop.permute.xlu0 %2638
      %2640 = vrot.lane.b32.xlu0 %v1936, 56
      %v2641 = vpop.permute.xlu0 %2640
      %2642 = vrot.lane.b32.xlu0 %v1948, 56
      %v2643 = vpop.permute.xlu0 %2642
      %2644 = vrot.lane.b32.xlu0 %v1949, 56
      %v2645 = vpop.permute.xlu0 %2644
      %2646 = vrot.lane.b32.xlu0 %v1950, 56
      %v2647 = vpop.permute.xlu0 %2646
      %2648 = vrot.lane.b32.xlu0 %v1944, 56
      %v2649 = vpop.permute.xlu0 %2648
      %2650 = vrot.lane.b32.xlu0 %v1973, 56
      %v2651 = vpop.permute.xlu0 %2650
      %2652 = vrot.lane.b32.xlu0 %v1974, 56
      %v2653 = vpop.permute.xlu0 %2652
      %2654 = vrot.lane.b32.xlu0 %v1975, 56
      %v2655 = vpop.permute.xlu0 %2654
      %2656 = vrot.lane.b32.xlu0 %v1964, 56
      %v2657 = vpop.permute.xlu0 %2656
      %2658 = vrot.lane.b32.xlu0 %v1976, 56
      %v2659 = vpop.permute.xlu0 %2658
      %2660 = vrot.lane.b32.xlu0 %v1977, 56
      %v2661 = vpop.permute.xlu0 %2660
      %2662 = vrot.lane.b32.xlu0 %v1978, 56
      %v2663 = vpop.permute.xlu0 %2662
      %2664 = vrot.lane.b32.xlu0 %v1972, 56
      %v2665 = vpop.permute.xlu0 %2664
      %2666 = vrot.lane.b32.xlu0 %v2001, 56
      %v2667 = vpop.permute.xlu0 %2666
      %2668 = vrot.lane.b32.xlu0 %v2002, 56
      %v2669 = vpop.permute.xlu0 %2668
      %2670 = vrot.lane.b32.xlu0 %v2003, 56
      %v2671 = vpop.permute.xlu0 %2670
      %2672 = vrot.lane.b32.xlu0 %v1992, 56
      %v2673 = vpop.permute.xlu0 %2672
      %2674 = vrot.lane.b32.xlu0 %v2004, 56
      %v2675 = vpop.permute.xlu0 %2674
      %2676 = vrot.lane.b32.xlu0 %v2005, 56
      %v2677 = vpop.permute.xlu0 %2676
      %2678 = vrot.lane.b32.xlu0 %v2006, 56
      %v2679 = vpop.permute.xlu0 %2678
      %2680 = vrot.lane.b32.xlu0 %v2000, 56
      %v2681 = vpop.permute.xlu0 %2680
      %2682 = vrot.lane.b32.xlu0 %v2029, 56
      %v2683 = vpop.permute.xlu0 %2682
      %2684 = vrot.lane.b32.xlu0 %v2030, 56
      %v2685 = vpop.permute.xlu0 %2684
      %2686 = vrot.lane.b32.xlu0 %v2031, 56
      %v2687 = vpop.permute.xlu0 %2686
      %2688 = vrot.lane.b32.xlu0 %v2020, 56
      %v2689 = vpop.permute.xlu0 %2688
      %2690 = vrot.lane.b32.xlu0 %v2032, 56
      %v2691 = vpop.permute.xlu0 %2690
      %2692 = vrot.lane.b32.xlu0 %v2033, 56
      %v2693 = vpop.permute.xlu0 %2692
      %2694 = vrot.lane.b32.xlu0 %v2034, 56
      %v2695 = vpop.permute.xlu0 %2694
      %2696 = vrot.lane.b32.xlu0 %v2028, 56
      %v2697 = vpop.permute.xlu0 %2696
      %v2698 = vsel %vm1025, %v2619, %v2621
      %v2699 = vsel %vm1025, %v2621, %v2623
      %v2700 = vsel %vm1025, %v2623, %v2625
      %v2701 = vsel %vm1025, %v2627, %v2629
      %v2702 = vsel %vm1025, %v2629, %v2631
      %v2703 = vsel %vm1025, %v2631, %v2633
      %v2704 = vsel %vm1025, %v2635, %v2637
      %v2705 = vsel %vm1025, %v2637, %v2639
      %v2706 = vsel %vm1025, %v2639, %v2641
      %v2707 = vsel %vm1025, %v2643, %v2645
      %v2708 = vsel %vm1025, %v2645, %v2647
      %v2709 = vsel %vm1025, %v2647, %v2649
      %v2710 = vsel %vm1025, %v2651, %v2653
      %v2711 = vsel %vm1025, %v2653, %v2655
      %v2712 = vsel %vm1025, %v2655, %v2657
      %v2713 = vsel %vm1025, %v2659, %v2661
      %v2714 = vsel %vm1025, %v2661, %v2663
      %v2715 = vsel %vm1025, %v2663, %v2665
      %v2716 = vsel %vm1025, %v2667, %v2669
      %v2717 = vsel %vm1025, %v2669, %v2671
      %v2718 = vsel %vm1025, %v2671, %v2673
      %v2719 = vsel %vm1025, %v2675, %v2677
      %v2720 = vsel %vm1025, %v2677, %v2679
      %v2721 = vsel %vm1025, %v2679, %v2681
      %v2722 = vsel %vm1025, %v2683, %v2685
      %v2723 = vsel %vm1025, %v2685, %v2687
      %v2724 = vsel %vm1025, %v2687, %v2689
      %v2725 = vsel %vm1025, %v2691, %v2693
      %v2726 = vsel %vm1025, %v2693, %v2695
      %v2727 = vsel %vm1025, %v2695, %v2697
      %v2759 = vsel %vm2048, %v2615, 0
      %2761 = vmatpush.bf16.msra.mxu0 %v2719
      %2762 = vmatpush.bf16.msra.mxu0 %v2716
      %2763 = vmatpush.bf16.msra.mxu0 %v2713
      %2764 = vmatpush.bf16.msra.mxu0 %v2710
      %2765 = vmatpush.bf16.msra.mxu0 %v2707
      %2766 = vmatpush.bf16.msra.mxu0 %v2704
      %2767 = vmatpush.bf16.msra.mxu0 %v2701
      %2768 = vmatpush.bf16.msra.mxu0 %v2698
      %2769 = vmatmul.bf16.gmra.mxu0 %v2616
      %v2770 = vpop.f32.mrf.mxu0
      %v2771 = vadd.f32 0.0, %v2770
      %v2772 = vpop.f32.mrf.mxu0
      %2773 = vdwg.mxu0
      %2774 = vmatpush.bf16.msra.mxu0 0
      %2775 = vmatpush.bf16.msra.mxu0 0
      %2776 = vmatpush.bf16.msra.mxu0 0
      %2777 = vmatpush.bf16.msra.mxu0 0
      %2778 = vmatpush.bf16.msra.mxu0 0
      %2779 = vmatpush.bf16.msra.mxu0 0
      %2780 = vmatpush.bf16.msra.mxu0 %v2725
      %2781 = vmatpush.bf16.msra.mxu0 %v2722
      %2782 = vmatmul.bf16.gmra.mxu0 %v2759
      %v2783 = vpop.f32.mrf.mxu0
      %v2784 = vadd.f32 %v2771, %v2783
      %v2785 = vpop.f32.mrf.mxu0
      %2786 = vdwg.mxu0
      %2787 = vmatpush.bf16.msra.mxu0 %v2720
      %2788 = vmatpush.bf16.msra.mxu0 %v2717
      %2789 = vmatpush.bf16.msra.mxu0 %v2714
      %2790 = vmatpush.bf16.msra.mxu0 %v2711
      %2791 = vmatpush.bf16.msra.mxu0 %v2708
      %2792 = vmatpush.bf16.msra.mxu0 %v2705
      %2793 = vmatpush.bf16.msra.mxu0 %v2702
      %2794 = vmatpush.bf16.msra.mxu0 %v2699
      %2795 = vmatmul.bf16.gmra.mxu0 %v2616
      %v2796 = vpop.f32.mrf.mxu0
      %v2797 = vadd.f32 0.0, %v2796
      %v2798 = vpop.f32.mrf.mxu0
      %2799 = vdwg.mxu0
      %2800 = vmatpush.bf16.msra.mxu0 0
      %2801 = vmatpush.bf16.msra.mxu0 0
      %2802 = vmatpush.bf16.msra.mxu0 0
      %2803 = vmatpush.bf16.msra.mxu0 0
      %2804 = vmatpush.bf16.msra.mxu0 0
      %2805 = vmatpush.bf16.msra.mxu0 0
      %2806 = vmatpush.bf16.msra.mxu0 %v2726
      %2807 = vmatpush.bf16.msra.mxu0 %v2723
      %2808 = vmatmul.bf16.gmra.mxu0 %v2759
      %v2809 = vpop.f32.mrf.mxu0
      %v2810 = vadd.f32 %v2797, %v2809
      %v2811 = vpop.f32.mrf.mxu0
      %2812 = vdwg.mxu0
      %2813 = vmatpush.bf16.msra.mxu0 %v2721
      %2814 = vmatpush.bf16.msra.mxu0 %v2718
      %2815 = vmatpush.bf16.msra.mxu0 %v2715
      %2816 = vmatpush.bf16.msra.mxu0 %v2712
      %2817 = vmatpush.bf16.msra.mxu0 %v2709
      %2818 = vmatpush.bf16.msra.mxu0 %v2706
      %2819 = vmatpush.bf16.msra.mxu0 %v2703
      %2820 = vmatpush.bf16.msra.mxu0 %v2700
      %2821 = vmatmul.bf16.gmra.mxu0 %v2616
      %v2822 = vpop.f32.mrf.mxu0
      %v2823 = vadd.f32 0.0, %v2822
      %v2824 = vpop.f32.mrf.mxu0
      %2825 = vdwg.mxu0
      %2826 = vmatpush.bf16.msra.mxu0 0
      %2827 = vmatpush.bf16.msra.mxu0 0
      %2828 = vmatpush.bf16.msra.mxu0 0
      %2829 = vmatpush.bf16.msra.mxu0 0
      %2830 = vmatpush.bf16.msra.mxu0 0
      %2831 = vmatpush.bf16.msra.mxu0 0
      %2832 = vmatpush.bf16.msra.mxu0 %v2727
      %2833 = vmatpush.bf16.msra.mxu0 %v2724
      %2834 = vmatmul.bf16.gmra.mxu0 %v2759
      %v2835 = vpop.f32.mrf.mxu0
      %v2836 = vadd.f32 %v2823, %v2835
      %v2837 = vpop.f32.mrf.mxu0
      %2838 = vdwg.mxu0
      %v2839 = vadd.f32 %v2603, %v2784
      %v2840 = vadd.f32 %v2604, %v2810
      %v2841 = vadd.f32 %v2605, %v2836
      %v2842 = vld [vmem:[%s5 + $0x14] sm:$0xff]
      %v2844 = vunpack.c.l.b16 %v2842
      %v2845 = vunpack.c.h.b16 %v2842
      %v2846 = vpack.c.b16 %v2844, %v2844
      %v2847 = vpack.c.b16 %v2845, %v2845
      %2849 = vrot.lane.b32.xlu0 %v1910, 32
      %v2850 = vpop.permute.xlu0 %2849
      %2851 = vrot.lane.b32.xlu0 %v1899, 32
      %v2852 = vpop.permute.xlu0 %2851
      %2853 = vrot.lane.b32.xlu0 %v1900, 32
      %v2854 = vpop.permute.xlu0 %2853
      %2855 = vrot.lane.b32.xlu0 %v1916, 32
      %v2856 = vpop.permute.xlu0 %2855
      %2857 = vrot.lane.b32.xlu0 %v1913, 32
      %v2858 = vpop.permute.xlu0 %2857
      %2859 = vrot.lane.b32.xlu0 %v1901, 32
      %v2860 = vpop.permute.xlu0 %2859
      %2861 = vrot.lane.b32.xlu0 %v1902, 32
      %v2862 = vpop.permute.xlu0 %2861
      %2863 = vrot.lane.b32.xlu0 %v1918, 32
      %v2864 = vpop.permute.xlu0 %2863
      %2865 = vrot.lane.b32.xlu0 %v1945, 32
      %v2866 = vpop.permute.xlu0 %2865
      %2867 = vrot.lane.b32.xlu0 %v1946, 32
      %v2868 = vpop.permute.xlu0 %2867
      %2869 = vrot.lane.b32.xlu0 %v1947, 32
      %v2870 = vpop.permute.xlu0 %2869
      %2871 = vrot.lane.b32.xlu0 %v1936, 32
      %v2872 = vpop.permute.xlu0 %2871
      %2873 = vrot.lane.b32.xlu0 %v1948, 32
      %v2874 = vpop.permute.xlu0 %2873
      %2875 = vrot.lane.b32.xlu0 %v1949, 32
      %v2876 = vpop.permute.xlu0 %2875
      %2877 = vrot.lane.b32.xlu0 %v1950, 32
      %v2878 = vpop.permute.xlu0 %2877
      %2879 = vrot.lane.b32.xlu0 %v1944, 32
      %v2880 = vpop.permute.xlu0 %2879
      %2881 = vrot.lane.b32.xlu0 %v1973, 32
      %v2882 = vpop.permute.xlu0 %2881
      %2883 = vrot.lane.b32.xlu0 %v1974, 32
      %v2884 = vpop.permute.xlu0 %2883
      %2885 = vrot.lane.b32.xlu0 %v1975, 32
      %v2886 = vpop.permute.xlu0 %2885
      %2887 = vrot.lane.b32.xlu0 %v1964, 32
      %v2888 = vpop.permute.xlu0 %2887
      %2889 = vrot.lane.b32.xlu0 %v1976, 32
      %v2890 = vpop.permute.xlu0 %2889
      %2891 = vrot.lane.b32.xlu0 %v1977, 32
      %v2892 = vpop.permute.xlu0 %2891
      %2893 = vrot.lane.b32.xlu0 %v1978, 32
      %v2894 = vpop.permute.xlu0 %2893
      %2895 = vrot.lane.b32.xlu0 %v1972, 32
      %v2896 = vpop.permute.xlu0 %2895
      %2897 = vrot.lane.b32.xlu0 %v2001, 32
      %v2898 = vpop.permute.xlu0 %2897
      %2899 = vrot.lane.b32.xlu0 %v2002, 32
      %v2900 = vpop.permute.xlu0 %2899
      %2901 = vrot.lane.b32.xlu0 %v2003, 32
      %v2902 = vpop.permute.xlu0 %2901
      %2903 = vrot.lane.b32.xlu0 %v1992, 32
      %v2904 = vpop.permute.xlu0 %2903
      %2905 = vrot.lane.b32.xlu0 %v2004, 32
      %v2906 = vpop.permute.xlu0 %2905
      %2907 = vrot.lane.b32.xlu0 %v2005, 32
      %v2908 = vpop.permute.xlu0 %2907
      %2909 = vrot.lane.b32.xlu0 %v2006, 32
      %v2910 = vpop.permute.xlu0 %2909
      %2911 = vrot.lane.b32.xlu0 %v2000, 32
      %v2912 = vpop.permute.xlu0 %2911
      %2913 = vrot.lane.b32.xlu0 %v2029, 32
      %v2914 = vpop.permute.xlu0 %2913
      %2915 = vrot.lane.b32.xlu0 %v2030, 32
      %v2916 = vpop.permute.xlu0 %2915
      %2917 = vrot.lane.b32.xlu0 %v2031, 32
      %v2918 = vpop.permute.xlu0 %2917
      %2919 = vrot.lane.b32.xlu0 %v2020, 32
      %v2920 = vpop.permute.xlu0 %2919
      %2921 = vrot.lane.b32.xlu0 %v2032, 32
      %v2922 = vpop.permute.xlu0 %2921
      %2923 = vrot.lane.b32.xlu0 %v2033, 32
      %v2924 = vpop.permute.xlu0 %2923
      %2925 = vrot.lane.b32.xlu0 %v2034, 32
      %v2926 = vpop.permute.xlu0 %2925
      %2927 = vrot.lane.b32.xlu0 %v2028, 32
      %v2928 = vpop.permute.xlu0 %2927
      %v2929 = vsel %vm1072, %v2850, %v2852
      %v2930 = vsel %vm1072, %v2852, %v2854
      %v2931 = vsel %vm1072, %v2854, %v2856
      %v2932 = vsel %vm1072, %v2858, %v2860
      %v2933 = vsel %vm1072, %v2860, %v2862
      %v2934 = vsel %vm1072, %v2862, %v2864
      %v2935 = vsel %vm1072, %v2866, %v2868
      %v2936 = vsel %vm1072, %v2868, %v2870
      %v2937 = vsel %vm1072, %v2870, %v2872
      %v2938 = vsel %vm1072, %v2874, %v2876
      %v2939 = vsel %vm1072, %v2876, %v2878
      %v2940 = vsel %vm1072, %v2878, %v2880
      %v2941 = vsel %vm1072, %v2882, %v2884
      %v2942 = vsel %vm1072, %v2884, %v2886
      %v2943 = vsel %vm1072, %v2886, %v2888
      %v2944 = vsel %vm1072, %v2890, %v2892
      %v2945 = vsel %vm1072, %v2892, %v2894
      %v2946 = vsel %vm1072, %v2894, %v2896
      %v2947 = vsel %vm1072, %v2898, %v2900
      %v2948 = vsel %vm1072, %v2900, %v2902
      %v2949 = vsel %vm1072, %v2902, %v2904
      %v2950 = vsel %vm1072, %v2906, %v2908
      %v2951 = vsel %vm1072, %v2908, %v2910
      %v2952 = vsel %vm1072, %v2910, %v2912
      %v2953 = vsel %vm1072, %v2914, %v2916
      %v2954 = vsel %vm1072, %v2916, %v2918
      %v2955 = vsel %vm1072, %v2918, %v2920
      %v2956 = vsel %vm1072, %v2922, %v2924
      %v2957 = vsel %vm1072, %v2924, %v2926
      %v2958 = vsel %vm1072, %v2926, %v2928
      %v2990 = vsel %vm2048, %v2847, 0
      %2992 = vmatpush.bf16.msra.mxu0 %v2950
      %2993 = vmatpush.bf16.msra.mxu0 %v2947
      %2994 = vmatpush.bf16.msra.mxu0 %v2944
      %2995 = vmatpush.bf16.msra.mxu0 %v2941
      %2996 = vmatpush.bf16.msra.mxu0 %v2938
      %2997 = vmatpush.bf16.msra.mxu0 %v2935
      %2998 = vmatpush.bf16.msra.mxu0 %v2932
      %2999 = vmatpush.bf16.msra.mxu0 %v2929
      %3000 = vmatmul.bf16.gmra.mxu0 %v2846
      %v3001 = vpop.f32.mrf.mxu0
      %v3002 = vadd.f32 0.0, %v3001
      %v3003 = vpop.f32.mrf.mxu0
      %3004 = vdwg.mxu0
      %3005 = vmatpush.bf16.msra.mxu0 0
      %3006 = vmatpush.bf16.msra.mxu0 0
      %3007 = vmatpush.bf16.msra.mxu0 0
      %3008 = vmatpush.bf16.msra.mxu0 0
      %3009 = vmatpush.bf16.msra.mxu0 0
      %3010 = vmatpush.bf16.msra.mxu0 0
      %3011 = vmatpush.bf16.msra.mxu0 %v2956
      %3012 = vmatpush.bf16.msra.mxu0 %v2953
      %3013 = vmatmul.bf16.gmra.mxu0 %v2990
      %v3014 = vpop.f32.mrf.mxu0
      %v3015 = vadd.f32 %v3002, %v3014
      %v3016 = vpop.f32.mrf.mxu0
      %3017 = vdwg.mxu0
      %3018 = vmatpush.bf16.msra.mxu0 %v2951
      %3019 = vmatpush.bf16.msra.mxu0 %v2948
      %3020 = vmatpush.bf16.msra.mxu0 %v2945
      %3021 = vmatpush.bf16.msra.mxu0 %v2942
      %3022 = vmatpush.bf16.msra.mxu0 %v2939
      %3023 = vmatpush.bf16.msra.mxu0 %v2936
      %3024 = vmatpush.bf16.msra.mxu0 %v2933
      %3025 = vmatpush.bf16.msra.mxu0 %v2930
      %3026 = vmatmul.bf16.gmra.mxu0 %v2846
      %v3027 = vpop.f32.mrf.mxu0
      %v3028 = vadd.f32 0.0, %v3027
      %v3029 = vpop.f32.mrf.mxu0
      %3030 = vdwg.mxu0
      %3031 = vmatpush.bf16.msra.mxu0 0
      %3032 = vmatpush.bf16.msra.mxu0 0
      %3033 = vmatpush.bf16.msra.mxu0 0
      %3034 = vmatpush.bf16.msra.mxu0 0
      %3035 = vmatpush.bf16.msra.mxu0 0
      %3036 = vmatpush.bf16.msra.mxu0 0
      %3037 = vmatpush.bf16.msra.mxu0 %v2957
      %3038 = vmatpush.bf16.msra.mxu0 %v2954
      %3039 = vmatmul.bf16.gmra.mxu0 %v2990
      %v3040 = vpop.f32.mrf.mxu0
      %v3041 = vadd.f32 %v3028, %v3040
      %v3042 = vpop.f32.mrf.mxu0
      %3043 = vdwg.mxu0
      %3044 = vmatpush.bf16.msra.mxu0 %v2952
      %3045 = vmatpush.bf16.msra.mxu0 %v2949
      %3046 = vmatpush.bf16.msra.mxu0 %v2946
      %3047 = vmatpush.bf16.msra.mxu0 %v2943
      %3048 = vmatpush.bf16.msra.mxu0 %v2940
      %3049 = vmatpush.bf16.msra.mxu0 %v2937
      %3050 = vmatpush.bf16.msra.mxu0 %v2934
      %3051 = vmatpush.bf16.msra.mxu0 %v2931
      %3052 = vmatmul.bf16.gmra.mxu0 %v2846
      %v3053 = vpop.f32.mrf.mxu0
      %v3054 = vadd.f32 0.0, %v3053
      %v3055 = vpop.f32.mrf.mxu0
      %3056 = vdwg.mxu0
      %3057 = vmatpush.bf16.msra.mxu0 0
      %3058 = vmatpush.bf16.msra.mxu0 0
      %3059 = vmatpush.bf16.msra.mxu0 0
      %3060 = vmatpush.bf16.msra.mxu0 0
      %3061 = vmatpush.bf16.msra.mxu0 0
      %3062 = vmatpush.bf16.msra.mxu0 0
      %3063 = vmatpush.bf16.msra.mxu0 %v2958
      %3064 = vmatpush.bf16.msra.mxu0 %v2955
      %3065 = vmatmul.bf16.gmra.mxu0 %v2990
      %v3066 = vpop.f32.mrf.mxu0
      %v3067 = vadd.f32 %v3054, %v3066
      %v3068 = vpop.f32.mrf.mxu0
      %3069 = vdwg.mxu0
      %v3070 = vadd.f32 %v2839, %v3015
      %v3071 = vadd.f32 %v2840, %v3041
      %v3072 = vadd.f32 %v2841, %v3067
      %3073 = vst [vmem:[%s305] sm:$0xff] %v3070
      %3074 = vst [vmem:[%s305 + $0x8] sm:$0xff] %v3071
      %3075 = vst [vmem:[%s305 + $0x10] sm:$0xff] %v3072
      %p3076 = scmp.lt.s32.totalorder %s19, 1
      %s3077 = scalar_select %p3076, %s19, 1
      %s3078 = smul.addr %s3077, 3
      %s3079 = smul.addr %s3078, 8
      %s3080 = scalar_lea.vmem %s8, %s3079
      // Predicated region
      $region53: #{edsr_forward.1} parent=51 // pred_check
        %p3081 = pneg %p210
      $region54: #{edsr_forward.1} parent=51 // pred_check_branch
        %3083 = sbr.rel (%p3081) target = $region56
      $region55: #{edsr_forward.1} parent=51 // pred_region
        _
      $region56: #{edsr_forward.1} parent=51 // pred_fallthru
        _
    $region52: #{edsr_forward.1} parent=5 // pred_fallthru
      _
    %p3084 = scmp.le.s32.totalorder 2, %s14
    // Predicated region
    $region57: #{edsr_forward.1} parent=5 // pred_check
      %p3085 = pneg %p3084
    $region58: #{edsr_forward.1} parent=5 // pred_check_branch
      %3087 = sbr.rel (%p3085) target = $region60
    $region59: #{edsr_forward.1} parent=5 // pred_region
      %s3088 = ssub.s32 %s14, 2
      // Predicated region
      $region61: #{edsr_forward.1} parent=59 // pred_check
        %p3089 = pneg %p216
      $region62: #{edsr_forward.1} parent=59 // pred_check_branch
        %3091 = sbr.rel (%p3089) target = $region64
      $region63: #{edsr_forward.1} parent=59 // pred_region
        %p3092 = scmp.lt.s32.totalorder %s20, 1
        %s3093 = scalar_select %p3092, %s20, 1
        %s3094 = smul.addr %s3093, 3
        %s3095 = smul.addr %s3094, 8
        %s3096 = scalar_lea.vmem %s8, %s3095
      $region64: #{edsr_forward.1} parent=59 // pred_fallthru
        _
    $region60: #{edsr_forward.1} parent=5 // pred_fallthru
      _
  $region6: #{edsr_forward.1} parent=0 // loop_footer
    %s18 = sadd.s32 1, %s14
  $region7: #{edsr_forward.1} parent=0 // loop_footer_branch
    %13 = sbr.rel target = $region3
  $region8: #{edsr_forward.1} parent=0 // loop_exit
    _

</llo_original>
